<compile_context>
chip_gen: v7x
topology: tpu7x:2x2x1
jax: 0.10.0
libtpu: 0.0.40
codegen_flags: <defaults>
</compile_context>

<pallas_src>
import functools

import jax
import jax.numpy as jnp
from jax import lax
from jax.experimental import pallas as pl
from jax.experimental.pallas import tpu as pltpu


def _tcn_kernel(*refs, L, levels):
    """Fused TemporalConvNet on one batch tile.

    refs = (x_ref, <per-level weight/bias refs...>, o_ref)
      x_ref : (C0, nb_l)    bf16   nb sequences folded along the lane axis
      level with downsample: wc (2*C_out, K*C_in) bf16, b1 (C_out,1) f32,
                             bd (C_out,1) f32, w2 (C_out, K*C_out) bf16,
                             b2 (C_out,1) f32
      level without:         w1 (C_out, K*C_in) bf16, b1, w2, b2
      o_ref : (C_last, nb_l) f32
    """
    x_ref, o_ref = refs[0], refs[-1]
    wrefs = list(refs[1:-1])
    nl = x_ref.shape[-1]
    # Position of every lane within its own length-L sequence (batch on lanes).
    t_in_seq = lax.broadcasted_iota(jnp.int32, (1, nl), 1) % L

    def causal_stack(v, K, dilation):
        # v: (C, nl) f32  ->  (K*C, nl) f32 im2col stack.
        # Row block k holds v shifted right by (K-1-k)*dilation within each
        # length-L segment, zeros shifted in (== causal left pad + Chomp1d).
        taps = []
        for k in range(K):
            s = (K - 1 - k) * dilation
            if s == 0:
                taps.append(v)
            else:
                shifted = pltpu.roll(v, s, 1)      # out[:, i] = v[:, (i - s) % nl]
                # Mask lanes t < s: covers both the causal zeros and any roll
                # wrap-around / cross-sequence leakage (padding < L asserted).
                taps.append(jnp.where(t_in_seq < s, 0.0, shifted))
        return jnp.concatenate(taps, axis=0)

    h_bf = x_ref[...]                              # bf16 carried activation
    out = None
    idx = 0
    for lvl in levels:                             # unrolled at trace time
        K = lvl["K"]
        dil = lvl["dilation"]
        C_out = lvl["C_out"]
        has_ds = lvl["has_downsample"]
        if has_ds:
            wc_ref, b1_ref, bd_ref, w2_ref, b2_ref = wrefs[idx:idx + 5]
            idx += 5
        else:
            wc_ref, b1_ref, w2_ref, b2_ref = wrefs[idx:idx + 4]
            idx += 4

        h_f32 = h_bf.astype(jnp.float32)

        # conv1 (+ fused 1x1 downsample rows): a single MXU pass.
        s1 = causal_stack(h_f32, K, dil).astype(jnp.bfloat16)
        y = jnp.dot(wc_ref[...], s1, preferred_element_type=jnp.float32)
        if has_ds:
            h1 = jnp.maximum(y[:C_out] + b1_ref[...], 0.0)
            res = y[C_out:] + bd_ref[...]          # downsample rode along for free
        else:
            h1 = jnp.maximum(y + b1_ref[...], 0.0)
            res = h_f32                            # identity residual, no matmul

        # conv2 + bias + ReLU (h1 never leaves vregs).
        s2 = causal_stack(h1, K, dil).astype(jnp.bfloat16)
        h2 = jnp.dot(w2_ref[...], s2, preferred_element_type=jnp.float32)
        h2 = jnp.maximum(h2 + b2_ref[...], 0.0)

        out = jnp.maximum(h2 + res, 0.0)           # final block ReLU
        h_bf = out.astype(jnp.bfloat16)            # next level's MXU input

    o_ref[...] = out                               # final level stays f32


def temporal_conv_net(x, params, *, kernel_size, batch_block):
    """TemporalConvNet forward. x: (N, C0, L); params: list of per-level dicts.

    Entire network runs as one pallas_call; grid is over batch tiles only.
    Returns (N, C_last, L) float32.
    """
    N, C0, L = x.shape
    NL = N * L
    K = kernel_size
    assert N % batch_block == 0, "demo keeps whole batch tiles"
    nb_l = batch_block * L
    # keep output stores lane-dense / block shapes tile-friendly
    assert nb_l % 128 == 0 or batch_block == N
    grid = (N // batch_block,)

    # Layout plumbing once: channel-major, batch*time folded on the lane axis.
    x_nl = jnp.transpose(x, (1, 0, 2)).reshape(C0, NL).astype(jnp.bfloat16)

    def full_spec(shape):                          # whole array, grid-invariant
        return pl.BlockSpec(shape, lambda i: (0,) * len(shape))

    operands = [x_nl]
    in_specs = [pl.BlockSpec((C0, nb_l), lambda i: (0, i))]
    levels = []
    c_in = C0
    for lvl in params:
        C_out = lvl["w1"].shape[0]
        d, p = lvl["dilation"], lvl["padding"]
        assert p == (K - 1) * d
        assert p < L, "causal context must fit inside one sequence tile"
        # im2col-flattened bf16 MXU weights; stack rows are tap-major (k*C + c).
        w1f = jnp.transpose(lvl["w1"], (0, 2, 1)).reshape(C_out, K * c_in)
        w2f = jnp.transpose(lvl["w2"], (0, 2, 1)).reshape(C_out, K * C_out)
        b1 = lvl["b1"].reshape(C_out, 1).astype(jnp.float32)
        b2 = lvl["b2"].reshape(C_out, 1).astype(jnp.float32)
        has_ds = lvl["wd"] is not None
        if has_ds:
            # Embed the 1x1 downsample into the shift-0 tap's columns so conv1
            # and the residual projection share one matmul.
            wd_pad = jnp.zeros((C_out, K * c_in), jnp.float32)
            wd_pad = wd_pad.at[:, (K - 1) * c_in:].set(lvl["wd"])
            wc = jnp.concatenate([w1f, wd_pad], axis=0).astype(jnp.bfloat16)
            bd = lvl["bd"].reshape(C_out, 1).astype(jnp.float32)
            lvl_ops = [wc, b1, bd, w2f.astype(jnp.bfloat16), b2]
        else:
            lvl_ops = [w1f.astype(jnp.bfloat16), b1,
                       w2f.astype(jnp.bfloat16), b2]
        operands += lvl_ops
        in_specs += [full_spec(op.shape) for op in lvl_ops]
        levels.append(dict(K=K, dilation=d, C_out=C_out, has_downsample=has_ds))
        c_in = C_out

    C_last = c_in
    kern = functools.partial(_tcn_kernel, L=L, levels=tuple(levels))

    out = pl.pallas_call(
        kern,
        out_shape=jax.ShapeDtypeStruct((C_last, NL), jnp.float32),
        grid=grid,
        in_specs=in_specs,
        out_specs=pl.BlockSpec((C_last, nb_l), lambda i: (0, i)),
        compiler_params=pltpu.CompilerParams(
            dimension_semantics=("parallel",),
            vmem_limit_bytes=32 * 1024 * 1024),
    )(*operands)

    return jnp.transpose(out.reshape(C_last, N, L), (1, 0, 2))


def _tcn_reference(x, params, *, quantize_mxu_operands):
    """Pure-JAX mirror of the PyTorch eval-mode forward.

    With quantize_mxu_operands=True, conv/matmul operands are rounded to bf16
    (accumulation in f32) to match the kernel's MXU input precision.
    """
    if quantize_mxu_operands:
        q = lambda a: a.astype(jnp.bfloat16).astype(jnp.float32)
    else:
        q = lambda a: a
    L = x.shape[-1]
    h = x
    for lvl in params:
        d, p = lvl["dilation"], lvl["padding"]
        xin = q(h)

        def conv(inp, w):
            y = lax.conv_general_dilated(
                inp, q(w), window_strides=(1,), padding=[(p, p)],
                rhs_dilation=(d,), dimension_numbers=("NCH", "OIH", "NCH"),
                precision=lax.Precision.HIGHEST)
            return y[:, :, :L]                     # Chomp1d

        a = jnp.maximum(conv(xin, lvl["w1"]) + lvl["b1"][None, :, None], 0.0)
        a = jnp.maximum(conv(q(a), lvl["w2"]) + lvl["b2"][None, :, None], 0.0)
        if lvl["wd"] is None:
            res = xin
        else:
            res = jnp.einsum("oc,ncl->nol", q(lvl["wd"]), xin,
                             precision=lax.Precision.HIGHEST) + lvl["bd"][None, :, None]
        h = jnp.maximum(a + res, 0.0)
    return h


if __name__ == "__main__":
    # TemporalConvNet(num_inputs=8, num_channels=[16, 16], kernel_size=3, dropout=0.2)
    N, C0, L, K = 64, 8, 16, 3
    num_channels = (16, 16)
    batch_block = 32    # nb_l = 512 lanes per grid step; grid=(2,) keeps both v7x TCs busy

    key = jax.random.PRNGKey(0)
    x_key, key = jax.random.split(key)
    x = jax.random.normal(x_key, (N, C0, L), jnp.float32)

    params = []
    c_in = C0
    for i, c_out in enumerate(num_channels):
        d = 2 ** i
        p = (K - 1) * d
        ks = jax.random.split(jax.random.fold_in(key, i), 6)
        # Effective (post weight_norm) weights ~ N(0, 0.01) as in init_weights().
        lvl = dict(
            w1=0.01 * jax.random.normal(ks[0], (c_out, c_in, K), jnp.float32),
            b1=0.01 * jax.random.normal(ks[1], (c_out,), jnp.float32),
            w2=0.01 * jax.random.normal(ks[2], (c_out, c_out, K), jnp.float32),
            b2=0.01 * jax.random.normal(ks[3], (c_out,), jnp.float32),
            dilation=d, padding=p)
        if c_in != c_out:
            lvl["wd"] = 0.01 * jax.random.normal(ks[4], (c_out, c_in), jnp.float32)
            lvl["bd"] = 0.01 * jax.random.normal(ks[5], (c_out,), jnp.float32)
        else:
            lvl["wd"] = None
            lvl["bd"] = None
        params.append(lvl)
        c_in = c_out

    out = temporal_conv_net(x, params, kernel_size=K, batch_block=batch_block)
    out = jax.block_until_ready(out)

    ref_q = _tcn_reference(x, params, quantize_mxu_operands=True)   # matches kernel precision
    ref_f = _tcn_reference(x, params, quantize_mxu_operands=False)  # pure f32 PyTorch mirror

    assert out.shape == (N, num_channels[-1], L)
    assert jnp.allclose(out, ref_q, atol=1e-3, rtol=1e-2), \
        float(jnp.max(jnp.abs(out - ref_q)))
    assert jnp.allclose(out, ref_f, atol=7e-3, rtol=5e-2), \
        float(jnp.max(jnp.abs(out - ref_f)))
    print("KERNEL_OK")
</pallas_src>

<mosaic_0001>
module attributes {stable_mosaic.version = 11 : i64} {
  func.func @_tcn_kernel(%arg0: i32, %arg1: memref<8x512xbf16, #tpu.memory_space<vmem>>, %arg2: memref<32x24xbf16, #tpu.memory_space<vmem>>, %arg3: memref<16x1xf32, #tpu.memory_space<vmem>>, %arg4: memref<16x1xf32, #tpu.memory_space<vmem>>, %arg5: memref<16x48xbf16, #tpu.memory_space<vmem>>, %arg6: memref<16x1xf32, #tpu.memory_space<vmem>>, %arg7: memref<16x48xbf16, #tpu.memory_space<vmem>>, %arg8: memref<16x1xf32, #tpu.memory_space<vmem>>, %arg9: memref<16x48xbf16, #tpu.memory_space<vmem>>, %arg10: memref<16x1xf32, #tpu.memory_space<vmem>>, %arg11: memref<16x512xf32, #tpu.memory_space<vmem>>) attributes {dimension_semantics = [#tpu.dimension_semantics<parallel>], iteration_bounds = array<i64: 2>, scalar_prefetch = 0 : i64, scratch_operands = 0 : i64, tpu.core_type = #tpu.core_type<tc>, window_params = [{transform_indices = @transform_0, window_bounds = array<i64: 8, 512>}, {pipeline_mode = #tpu.pipeline_mode<synchronous>, transform_indices = @transform_1, window_bounds = array<i64: 32, 24>}, {pipeline_mode = #tpu.pipeline_mode<synchronous>, transform_indices = @transform_2, window_bounds = array<i64: 16, 1>}, {pipeline_mode = #tpu.pipeline_mode<synchronous>, transform_indices = @transform_3, window_bounds = array<i64: 16, 1>}, {pipeline_mode = #tpu.pipeline_mode<synchronous>, transform_indices = @transform_4, window_bounds = array<i64: 16, 48>}, {pipeline_mode = #tpu.pipeline_mode<synchronous>, transform_indices = @transform_5, window_bounds = array<i64: 16, 1>}, {pipeline_mode = #tpu.pipeline_mode<synchronous>, transform_indices = @transform_6, window_bounds = array<i64: 16, 48>}, {pipeline_mode = #tpu.pipeline_mode<synchronous>, transform_indices = @transform_7, window_bounds = array<i64: 16, 1>}, {pipeline_mode = #tpu.pipeline_mode<synchronous>, transform_indices = @transform_8, window_bounds = array<i64: 16, 48>}, {pipeline_mode = #tpu.pipeline_mode<synchronous>, transform_indices = @transform_9, window_bounds = array<i64: 16, 1>}, {transform_indices = @transform_10, window_bounds = array<i64: 16, 512>}]} {
    %0 = tpu.iota {dimensions = array<i32: 1>} : vector<1x512xi32>
    %c16_i32 = arith.constant 16 : i32
    %c0_i32 = arith.constant 0 : i32
    %1 = arith.cmpi eq, %c16_i32, %c0_i32 : i32
    %c1_i32 = arith.constant 1 : i32
    %2 = arith.select %1, %c1_i32, %c16_i32 : i32
    %3 = vector.broadcast %2 : i32 to vector<1x512xi32>
    %4 = arith.remsi %0, %3 : vector<1x512xi32>
    %c0_i32_0 = arith.constant 0 : i32
    %5 = vector.broadcast %c0_i32_0 : i32 to vector<1x512xi32>
    %6 = arith.cmpi ne, %4, %5 : vector<1x512xi32>
    %c0_i32_1 = arith.constant 0 : i32
    %7 = vector.broadcast %c0_i32_1 : i32 to vector<1x512xi32>
    %8 = arith.cmpi slt, %4, %7 : vector<1x512xi32>
    %c0_i32_2 = arith.constant 0 : i32
    %9 = arith.cmpi slt, %2, %c0_i32_2 : i32
    %10 = vector.broadcast %9 : i1 to vector<1x512xi1>
    %11 = vector.broadcast %10 : vector<1x512xi1> to vector<1x512xi1>
    %12 = arith.xori %8, %11 : vector<1x512xi1>
    %13 = arith.andi %12, %6 : vector<1x512xi1>
    %14 = vector.broadcast %2 : i32 to vector<1x512xi32>
    %15 = arith.addi %4, %14 : vector<1x512xi32>
    %16 = arith.select %13, %15, %4 : vector<1x512xi1>, vector<1x512xi32>
    %c0 = arith.constant 0 : index
    %c0_3 = arith.constant 0 : index
    %17 = vector.load %arg1[%c0, %c0_3] : memref<8x512xbf16, #tpu.memory_space<vmem>>, vector<8x512xbf16>
    %18 = arith.extf %17 : vector<8x512xbf16> to vector<8x512xf32>
    %c2_i32 = arith.constant 2 : i32
    %19 = tpu.dynamic_rotate %18 by %c2_i32 dim 1 : vector<8x512xf32>, i32 -> vector<8x512xf32>
    %c2_i32_4 = arith.constant 2 : i32
    %20 = vector.broadcast %c2_i32_4 : i32 to vector<1x512xi32>
    %21 = arith.cmpi slt, %16, %20 : vector<1x512xi32>
    %cst = arith.constant 0.000000e+00 : f32
    %22 = vector.shape_cast %21 : vector<1x512xi1> to vector<1x512xi1>
    %23 = vector.broadcast %22 : vector<1x512xi1> to vector<8x512xi1>
    %24 = vector.broadcast %cst : f32 to vector<8x512xf32>
    %25 = arith.select %23, %24, %19 : vector<8x512xi1>, vector<8x512xf32>
    %c1_i32_5 = arith.constant 1 : i32
    %26 = tpu.dynamic_rotate %18 by %c1_i32_5 dim 1 : vector<8x512xf32>, i32 -> vector<8x512xf32>
    %c1_i32_6 = arith.constant 1 : i32
    %27 = vector.broadcast %c1_i32_6 : i32 to vector<1x512xi32>
    %28 = arith.cmpi slt, %16, %27 : vector<1x512xi32>
    %cst_7 = arith.constant 0.000000e+00 : f32
    %29 = vector.shape_cast %28 : vector<1x512xi1> to vector<1x512xi1>
    %30 = vector.broadcast %29 : vector<1x512xi1> to vector<8x512xi1>
    %31 = vector.broadcast %cst_7 : f32 to vector<8x512xf32>
    %32 = arith.select %30, %31, %26 : vector<8x512xi1>, vector<8x512xf32>
    %33 = tpu.concatenate %25, %32, %18 in 0 : vector<8x512xf32>, vector<8x512xf32>, vector<8x512xf32> -> vector<24x512xf32>
    %34 = arith.truncf %33 : vector<24x512xf32> to vector<24x512xbf16>
    %c0_8 = arith.constant 0 : index
    %c0_9 = arith.constant 0 : index
    %35 = vector.load %arg2[%c0_8, %c0_9] : memref<32x24xbf16, #tpu.memory_space<vmem>>, vector<32x24xbf16>
    %cst_10 = arith.constant dense<0.000000e+00> : vector<32x512xf32>
    %36 = tpu.matmul %35, %34, %cst_10 {dimension_numbers = #tpu.dot_dimension_numbers<[1], [0], [0], [1], [0, 0, 1, 1], [], []>} : vector<32x24xbf16>, vector<24x512xbf16>, vector<32x512xf32> -> vector<32x512xf32>
    %37 = vector.extract_strided_slice %36 {offsets = [0, 0], sizes = [16, 512], strides = [1, 1]} : vector<32x512xf32> to vector<16x512xf32>
    %c0_11 = arith.constant 0 : index
    %c0_12 = arith.constant 0 : index
    %38 = vector.load %arg3[%c0_11, %c0_12] : memref<16x1xf32, #tpu.memory_space<vmem>>, vector<16x1xf32>
    %39 = vector.broadcast %38 : vector<16x1xf32> to vector<16x512xf32>
    %40 = arith.addf %37, %39 : vector<16x512xf32>
    %cst_13 = arith.constant 0.000000e+00 : f32
    %41 = vector.broadcast %cst_13 : f32 to vector<16x512xf32>
    %42 = arith.maximumf %40, %41 : vector<16x512xf32>
    %43 = vector.extract_strided_slice %36 {offsets = [16, 0], sizes = [16, 512], strides = [1, 1]} : vector<32x512xf32> to vector<16x512xf32>
    %c0_14 = arith.constant 0 : index
    %c0_15 = arith.constant 0 : index
    %44 = vector.load %arg4[%c0_14, %c0_15] : memref<16x1xf32, #tpu.memory_space<vmem>>, vector<16x1xf32>
    %45 = vector.broadcast %44 : vector<16x1xf32> to vector<16x512xf32>
    %46 = arith.addf %43, %45 : vector<16x512xf32>
    %c2_i32_16 = arith.constant 2 : i32
    %47 = tpu.dynamic_rotate %42 by %c2_i32_16 dim 1 : vector<16x512xf32>, i32 -> vector<16x512xf32>
    %c2_i32_17 = arith.constant 2 : i32
    %48 = vector.broadcast %c2_i32_17 : i32 to vector<1x512xi32>
    %49 = arith.cmpi slt, %16, %48 : vector<1x512xi32>
    %cst_18 = arith.constant 0.000000e+00 : f32
    %50 = vector.shape_cast %49 : vector<1x512xi1> to vector<1x512xi1>
    %51 = vector.broadcast %50 : vector<1x512xi1> to vector<16x512xi1>
    %52 = vector.broadcast %cst_18 : f32 to vector<16x512xf32>
    %53 = arith.select %51, %52, %47 : vector<16x512xi1>, vector<16x512xf32>
    %c1_i32_19 = arith.constant 1 : i32
    %54 = tpu.dynamic_rotate %42 by %c1_i32_19 dim 1 : vector<16x512xf32>, i32 -> vector<16x512xf32>
    %c1_i32_20 = arith.constant 1 : i32
    %55 = vector.broadcast %c1_i32_20 : i32 to vector<1x512xi32>
    %56 = arith.cmpi slt, %16, %55 : vector<1x512xi32>
    %cst_21 = arith.constant 0.000000e+00 : f32
    %57 = vector.shape_cast %56 : vector<1x512xi1> to vector<1x512xi1>
    %58 = vector.broadcast %57 : vector<1x512xi1> to vector<16x512xi1>
    %59 = vector.broadcast %cst_21 : f32 to vector<16x512xf32>
    %60 = arith.select %58, %59, %54 : vector<16x512xi1>, vector<16x512xf32>
    %61 = tpu.concatenate %53, %60, %42 in 0 : vector<16x512xf32>, vector<16x512xf32>, vector<16x512xf32> -> vector<48x512xf32>
    %62 = arith.truncf %61 : vector<48x512xf32> to vector<48x512xbf16>
    %c0_22 = arith.constant 0 : index
    %c0_23 = arith.constant 0 : index
    %63 = vector.load %arg5[%c0_22, %c0_23] : memref<16x48xbf16, #tpu.memory_space<vmem>>, vector<16x48xbf16>
    %cst_24 = arith.constant dense<0.000000e+00> : vector<16x512xf32>
    %64 = tpu.matmul %63, %62, %cst_24 {dimension_numbers = #tpu.dot_dimension_numbers<[1], [0], [0], [1], [0, 0, 1, 1], [], []>} : vector<16x48xbf16>, vector<48x512xbf16>, vector<16x512xf32> -> vector<16x512xf32>
    %c0_25 = arith.constant 0 : index
    %c0_26 = arith.constant 0 : index
    %65 = vector.load %arg6[%c0_25, %c0_26] : memref<16x1xf32, #tpu.memory_space<vmem>>, vector<16x1xf32>
    %66 = vector.broadcast %65 : vector<16x1xf32> to vector<16x512xf32>
    %67 = arith.addf %64, %66 : vector<16x512xf32>
    %cst_27 = arith.constant 0.000000e+00 : f32
    %68 = vector.broadcast %cst_27 : f32 to vector<16x512xf32>
    %69 = arith.maximumf %67, %68 : vector<16x512xf32>
    %70 = arith.addf %69, %46 : vector<16x512xf32>
    %cst_28 = arith.constant 0.000000e+00 : f32
    %71 = vector.broadcast %cst_28 : f32 to vector<16x512xf32>
    %72 = arith.maximumf %70, %71 : vector<16x512xf32>
    %73 = arith.truncf %72 : vector<16x512xf32> to vector<16x512xbf16>
    %74 = arith.extf %73 : vector<16x512xbf16> to vector<16x512xf32>
    %c4_i32 = arith.constant 4 : i32
    %75 = tpu.dynamic_rotate %74 by %c4_i32 dim 1 : vector<16x512xf32>, i32 -> vector<16x512xf32>
    %c4_i32_29 = arith.constant 4 : i32
    %76 = vector.broadcast %c4_i32_29 : i32 to vector<1x512xi32>
    %77 = arith.cmpi slt, %16, %76 : vector<1x512xi32>
    %cst_30 = arith.constant 0.000000e+00 : f32
    %78 = vector.shape_cast %77 : vector<1x512xi1> to vector<1x512xi1>
    %79 = vector.broadcast %78 : vector<1x512xi1> to vector<16x512xi1>
    %80 = vector.broadcast %cst_30 : f32 to vector<16x512xf32>
    %81 = arith.select %79, %80, %75 : vector<16x512xi1>, vector<16x512xf32>
    %c2_i32_31 = arith.constant 2 : i32
    %82 = tpu.dynamic_rotate %74 by %c2_i32_31 dim 1 : vector<16x512xf32>, i32 -> vector<16x512xf32>
    %c2_i32_32 = arith.constant 2 : i32
    %83 = vector.broadcast %c2_i32_32 : i32 to vector<1x512xi32>
    %84 = arith.cmpi slt, %16, %83 : vector<1x512xi32>
    %cst_33 = arith.constant 0.000000e+00 : f32
    %85 = vector.shape_cast %84 : vector<1x512xi1> to vector<1x512xi1>
    %86 = vector.broadcast %85 : vector<1x512xi1> to vector<16x512xi1>
    %87 = vector.broadcast %cst_33 : f32 to vector<16x512xf32>
    %88 = arith.select %86, %87, %82 : vector<16x512xi1>, vector<16x512xf32>
    %89 = tpu.concatenate %81, %88, %74 in 0 : vector<16x512xf32>, vector<16x512xf32>, vector<16x512xf32> -> vector<48x512xf32>
    %90 = arith.truncf %89 : vector<48x512xf32> to vector<48x512xbf16>
    %c0_34 = arith.constant 0 : index
    %c0_35 = arith.constant 0 : index
    %91 = vector.load %arg7[%c0_34, %c0_35] : memref<16x48xbf16, #tpu.memory_space<vmem>>, vector<16x48xbf16>
    %cst_36 = arith.constant dense<0.000000e+00> : vector<16x512xf32>
    %92 = tpu.matmul %91, %90, %cst_36 {dimension_numbers = #tpu.dot_dimension_numbers<[1], [0], [0], [1], [0, 0, 1, 1], [], []>} : vector<16x48xbf16>, vector<48x512xbf16>, vector<16x512xf32> -> vector<16x512xf32>
    %c0_37 = arith.constant 0 : index
    %c0_38 = arith.constant 0 : index
    %93 = vector.load %arg8[%c0_37, %c0_38] : memref<16x1xf32, #tpu.memory_space<vmem>>, vector<16x1xf32>
    %94 = vector.broadcast %93 : vector<16x1xf32> to vector<16x512xf32>
    %95 = arith.addf %92, %94 : vector<16x512xf32>
    %cst_39 = arith.constant 0.000000e+00 : f32
    %96 = vector.broadcast %cst_39 : f32 to vector<16x512xf32>
    %97 = arith.maximumf %95, %96 : vector<16x512xf32>
    %c4_i32_40 = arith.constant 4 : i32
    %98 = tpu.dynamic_rotate %97 by %c4_i32_40 dim 1 : vector<16x512xf32>, i32 -> vector<16x512xf32>
    %c4_i32_41 = arith.constant 4 : i32
    %99 = vector.broadcast %c4_i32_41 : i32 to vector<1x512xi32>
    %100 = arith.cmpi slt, %16, %99 : vector<1x512xi32>
    %cst_42 = arith.constant 0.000000e+00 : f32
    %101 = vector.shape_cast %100 : vector<1x512xi1> to vector<1x512xi1>
    %102 = vector.broadcast %101 : vector<1x512xi1> to vector<16x512xi1>
    %103 = vector.broadcast %cst_42 : f32 to vector<16x512xf32>
    %104 = arith.select %102, %103, %98 : vector<16x512xi1>, vector<16x512xf32>
    %c2_i32_43 = arith.constant 2 : i32
    %105 = tpu.dynamic_rotate %97 by %c2_i32_43 dim 1 : vector<16x512xf32>, i32 -> vector<16x512xf32>
    %c2_i32_44 = arith.constant 2 : i32
    %106 = vector.broadcast %c2_i32_44 : i32 to vector<1x512xi32>
    %107 = arith.cmpi slt, %16, %106 : vector<1x512xi32>
    %cst_45 = arith.constant 0.000000e+00 : f32
    %108 = vector.shape_cast %107 : vector<1x512xi1> to vector<1x512xi1>
    %109 = vector.broadcast %108 : vector<1x512xi1> to vector<16x512xi1>
    %110 = vector.broadcast %cst_45 : f32 to vector<16x512xf32>
    %111 = arith.select %109, %110, %105 : vector<16x512xi1>, vector<16x512xf32>
    %112 = tpu.concatenate %104, %111, %97 in 0 : vector<16x512xf32>, vector<16x512xf32>, vector<16x512xf32> -> vector<48x512xf32>
    %113 = arith.truncf %112 : vector<48x512xf32> to vector<48x512xbf16>
    %c0_46 = arith.constant 0 : index
    %c0_47 = arith.constant 0 : index
    %114 = vector.load %arg9[%c0_46, %c0_47] : memref<16x48xbf16, #tpu.memory_space<vmem>>, vector<16x48xbf16>
    %cst_48 = arith.constant dense<0.000000e+00> : vector<16x512xf32>
    %115 = tpu.matmul %114, %113, %cst_48 {dimension_numbers = #tpu.dot_dimension_numbers<[1], [0], [0], [1], [0, 0, 1, 1], [], []>} : vector<16x48xbf16>, vector<48x512xbf16>, vector<16x512xf32> -> vector<16x512xf32>
    %c0_49 = arith.constant 0 : index
    %c0_50 = arith.constant 0 : index
    %116 = vector.load %arg10[%c0_49, %c0_50] : memref<16x1xf32, #tpu.memory_space<vmem>>, vector<16x1xf32>
    %117 = vector.broadcast %116 : vector<16x1xf32> to vector<16x512xf32>
    %118 = arith.addf %115, %117 : vector<16x512xf32>
    %cst_51 = arith.constant 0.000000e+00 : f32
    %119 = vector.broadcast %cst_51 : f32 to vector<16x512xf32>
    %120 = arith.maximumf %118, %119 : vector<16x512xf32>
    %121 = arith.addf %120, %74 : vector<16x512xf32>
    %cst_52 = arith.constant 0.000000e+00 : f32
    %122 = vector.broadcast %cst_52 : f32 to vector<16x512xf32>
    %123 = arith.maximumf %121, %122 : vector<16x512xf32>
    %c0_53 = arith.constant 0 : index
    %c0_54 = arith.constant 0 : index
    %124 = vector.load %arg11[%c0_53, %c0_54] : memref<16x512xf32, #tpu.memory_space<vmem>>, vector<16x512xf32>
    tpu.vector_store %arg11[%c0_53, %c0_54], %123 {strides = array<i32>} : memref<16x512xf32, #tpu.memory_space<vmem>>, vector<16x512xf32>,
    return
  }
  func.func @transform_0(%arg0: i32) -> (i32, i32) {
    %c0_i32 = arith.constant 0 : i32
    %c0_i32_0 = arith.constant 0 : i32
    return %c0_i32, %arg0 : i32, i32
  }
  func.func @transform_1(%arg0: i32) -> (i32, i32) {
    %c0_i32 = arith.constant 0 : i32
    %c0_i32_0 = arith.constant 0 : i32
    %c0_i32_1 = arith.constant 0 : i32
    return %c0_i32, %c0_i32_0 : i32, i32
  }
  func.func @transform_2(%arg0: i32) -> (i32, i32) {
    %c0_i32 = arith.constant 0 : i32
    %c0_i32_0 = arith.constant 0 : i32
    %c0_i32_1 = arith.constant 0 : i32
    return %c0_i32, %c0_i32_0 : i32, i32
  }
  func.func @transform_3(%arg0: i32) -> (i32, i32) {
    %c0_i32 = arith.constant 0 : i32
    %c0_i32_0 = arith.constant 0 : i32
    %c0_i32_1 = arith.constant 0 : i32
    return %c0_i32, %c0_i32_0 : i32, i32
  }
  func.func @transform_4(%arg0: i32) -> (i32, i32) {
    %c0_i32 = arith.constant 0 : i32
    %c0_i32_0 = arith.constant 0 : i32
    %c0_i32_1 = arith.constant 0 : i32
    return %c0_i32, %c0_i32_0 : i32, i32
  }
  func.func @transform_5(%arg0: i32) -> (i32, i32) {
    %c0_i32 = arith.constant 0 : i32
    %c0_i32_0 = arith.constant 0 : i32
    %c0_i32_1 = arith.constant 0 : i32
    return %c0_i32, %c0_i32_0 : i32, i32
  }
  func.func @transform_6(%arg0: i32) -> (i32, i32) {
    %c0_i32 = arith.constant 0 : i32
    %c0_i32_0 = arith.constant 0 : i32
    %c0_i32_1 = arith.constant 0 : i32
    return %c0_i32, %c0_i32_0 : i32, i32
  }
  func.func @transform_7(%arg0: i32) -> (i32, i32) {
    %c0_i32 = arith.constant 0 : i32
    %c0_i32_0 = arith.constant 0 : i32
    %c0_i32_1 = arith.constant 0 : i32
    return %c0_i32, %c0_i32_0 : i32, i32
  }
  func.func @transform_8(%arg0: i32) -> (i32, i32) {
    %c0_i32 = arith.constant 0 : i32
    %c0_i32_0 = arith.constant 0 : i32
    %c0_i32_1 = arith.constant 0 : i32
    return %c0_i32, %c0_i32_0 : i32, i32
  }
  func.func @transform_9(%arg0: i32) -> (i32, i32) {
    %c0_i32 = arith.constant 0 : i32
    %c0_i32_0 = arith.constant 0 : i32
    %c0_i32_1 = arith.constant 0 : i32
    return %c0_i32, %c0_i32_0 : i32, i32
  }
  func.func @transform_10(%arg0: i32) -> (i32, i32) {
    %c0_i32 = arith.constant 0 : i32
    %c0_i32_0 = arith.constant 0 : i32
    return %c0_i32, %arg0 : i32, i32
  }
}

</mosaic_0001>

<llo_original>
// kernel: tpu_custom_call.1
$region0: #{tpu_custom_call.1}
  #allocation0 [shape = 'u32[]', space=smem, size = 0x4, offset = 0x4, fixed_abs, tag = 'smem constant byte address 0x4 - core index']
  #allocation1 [shape = 'u32[144,128]{1,0:T(1,128)}', space=vmem, size = 0x12000, scoped, tag = 'internal scratch']
  %s0 = inlined_call_operand.vmem [shape: bf16[8,1024], index: 0, kind: input, shape index: {}]
  %s1 = inlined_call_operand.vmem [shape: bf16[32,24], index: 1, kind: input, shape index: {}]
  %s2 = inlined_call_operand.vmem [shape: f32[16,1], index: 2, kind: input, shape index: {}]
  %s3 = inlined_call_operand.vmem [shape: f32[16,1], index: 3, kind: input, shape index: {}]
  %s4 = inlined_call_operand.vmem [shape: bf16[16,48], index: 4, kind: input, shape index: {}]
  %s5 = inlined_call_operand.vmem [shape: f32[16,1], index: 5, kind: input, shape index: {}]
  %s6 = inlined_call_operand.vmem [shape: bf16[16,48], index: 6, kind: input, shape index: {}]
  %s7 = inlined_call_operand.vmem [shape: f32[16,1], index: 7, kind: input, shape index: {}]
  %s8 = inlined_call_operand.vmem [shape: bf16[16,48], index: 8, kind: input, shape index: {}]
  %s9 = inlined_call_operand.vmem [shape: f32[16,1], index: 9, kind: input, shape index: {}]
  %s10 = inlined_call_operand.hbm [shape: f32[16,1024], index: 10, kind: output, shape index: {}]
  %s11 = sld [smem:[#allocation0]]
  $region73: #{tpu_custom_call.1} parent=0
    _
  %s13 = ssub.s32 1, %s11
  %s14 = scalar_select 0, %s13, %s11
  $region1: #{tpu_custom_call.1} parent=0
    #allocation2 [shape = 'u8[65536]{0}', space=vmem, size = 0x10000, scoped, tag = 'output window, operand 0']
    #allocation3 [shape = 's32[2]{0}', space=sflag, size = 0x8, scoped, tag = 'scoped memory for tpu_custom_call.1']
    %15 = vsyncpa [#allocation3], 0
    %s16 = scalar_lea.sflag [#allocation3], 1
    %17 = vsyncpa %s16, 0
    loop: start=0, step=1, limit=4
    $region2: #{tpu_custom_call.1} parent=1 // loop_pre_header
      _
    $region3: #{tpu_custom_call.1} parent=1 // loop_header
      %s19 = sphi 0, %s23
      %p20 = scmp.ge.s32.totalorder %s19, 4
      %s29 = sphi 0, %s31
      %s32 = sphi 0, %s29
      %s33 = sphi 0, %s32
      %s49 = sphi 0, %s33
      %s53 = sphi 0, %s53
      %s55 = sphi 0, %s53
      %s56 = sphi 0, %s55
      %s70 = sphi 0, %s56
      %s74 = sphi 0, %s74
      %s76 = sphi 0, %s74
      %s77 = sphi 0, %s76
      %s91 = sphi 0, %s77
      %s95 = sphi 0, %s95
      %s97 = sphi 0, %s95
      %s98 = sphi 0, %s97
      %s112 = sphi 0, %s98
      %s116 = sphi 0, %s116
      %s118 = sphi 0, %s116
      %s119 = sphi 0, %s118
      %s133 = sphi 0, %s119
      %s137 = sphi 0, %s137
      %s139 = sphi 0, %s137
      %s140 = sphi 0, %s139
      %s154 = sphi 0, %s140
      %s158 = sphi 0, %s158
      %s160 = sphi 0, %s158
      %s161 = sphi 0, %s160
      %s175 = sphi 0, %s161
      %s179 = sphi 0, %s179
      %s181 = sphi 0, %s179
      %s182 = sphi 0, %s181
      %s196 = sphi 0, %s182
      %s200 = sphi 0, %s200
      %s202 = sphi 0, %s200
      %s203 = sphi 0, %s202
      %s217 = sphi 0, %s203
      %s221 = sphi 0, %s221
      %s223 = sphi 0, %s221
      %s224 = sphi 0, %s223
      %s238 = sphi 0, %s224
      %s244 = sphi 0, %s246
      %s247 = sphi 0, %s244
      %s248 = sphi 0, %s247
      %s264 = sphi 0, %s248
    $region4: #{tpu_custom_call.1} parent=1 // loop_header_branch
      %22 = sbr.rel (%p20) target = $region8
    $region5: #{tpu_custom_call.1} parent=1 // loop_body
      %s24 = ssub.s32 %s19, 1
      %s25 = ssub.s32 %s19, 2
      %s26 = sadd.s32 %s19, 1
      %s27 = ssub.s32 %s19, %s26
      %p28 = scmp.eq.s32.totalorder %s27, 0
      %s30 = sadd.s32 %s29, 1
      %s31 = scalar_select %p28, %s29, %s30
      %p34 = pneg %p28
      %p35 = scmp.eq.s32.totalorder %s19, 1
      %p36 = por %p34, %p35
      %p37 = scmp.ne.s32.totalorder %s29, %s32
      %p38 = scmp.eq.s32.totalorder %s19, 0
      %p39 = por %p37, %p38
      %p40 = scmp.ne.s32.totalorder %s29, %s32
      %p41 = scmp.eq.s32.totalorder %s24, 1
      %p42 = por %p40, %p41
      %p43 = scmp.ne.s32.totalorder %s32, %s33
      %p44 = scmp.eq.s32.totalorder %s24, 0
      %p45 = por %p43, %p44
      %p46 = scmp.ne.s32.totalorder %s32, %s33
      %p47 = scmp.eq.s32.totalorder %s25, 1
      %p48 = por %p46, %p47
      %p50 = scmp.ne.s32.totalorder %s33, %s49
      %p51 = scmp.eq.s32.totalorder %s25, 0
      %p52 = por %p50, %p51
      %s54 = sadd.s32 %s53, 1
      %p57 = scmp.eq.s32.totalorder %s19, 1
      %p58 = scmp.ne.s32.totalorder %s53, %s55
      %p59 = scmp.eq.s32.totalorder %s19, 0
      %p60 = por %p58, %p59
      %p61 = scmp.ne.s32.totalorder %s53, %s55
      %p62 = scmp.eq.s32.totalorder %s24, 1
      %p63 = por %p61, %p62
      %p64 = scmp.ne.s32.totalorder %s55, %s56
      %p65 = scmp.eq.s32.totalorder %s24, 0
      %p66 = por %p64, %p65
      %p67 = scmp.ne.s32.totalorder %s55, %s56
      %p68 = scmp.eq.s32.totalorder %s25, 1
      %p69 = por %p67, %p68
      %p71 = scmp.ne.s32.totalorder %s56, %s70
      %p72 = scmp.eq.s32.totalorder %s25, 0
      %p73 = por %p71, %p72
      %s75 = sadd.s32 %s74, 1
      %p78 = scmp.eq.s32.totalorder %s19, 1
      %p79 = scmp.ne.s32.totalorder %s74, %s76
      %p80 = scmp.eq.s32.totalorder %s19, 0
      %p81 = por %p79, %p80
      %p82 = scmp.ne.s32.totalorder %s74, %s76
      %p83 = scmp.eq.s32.totalorder %s24, 1
      %p84 = por %p82, %p83
      %p85 = scmp.ne.s32.totalorder %s76, %s77
      %p86 = scmp.eq.s32.totalorder %s24, 0
      %p87 = por %p85, %p86
      %p88 = scmp.ne.s32.totalorder %s76, %s77
      %p89 = scmp.eq.s32.totalorder %s25, 1
      %p90 = por %p88, %p89
      %p92 = scmp.ne.s32.totalorder %s77, %s91
      %p93 = scmp.eq.s32.totalorder %s25, 0
      %p94 = por %p92, %p93
      %s96 = sadd.s32 %s95, 1
      %p99 = scmp.eq.s32.totalorder %s19, 1
      %p100 = scmp.ne.s32.totalorder %s95, %s97
      %p101 = scmp.eq.s32.totalorder %s19, 0
      %p102 = por %p100, %p101
      %p103 = scmp.ne.s32.totalorder %s95, %s97
      %p104 = scmp.eq.s32.totalorder %s24, 1
      %p105 = por %p103, %p104
      %p106 = scmp.ne.s32.totalorder %s97, %s98
      %p107 = scmp.eq.s32.totalorder %s24, 0
      %p108 = por %p106, %p107
      %p109 = scmp.ne.s32.totalorder %s97, %s98
      %p110 = scmp.eq.s32.totalorder %s25, 1
      %p111 = por %p109, %p110
      %p113 = scmp.ne.s32.totalorder %s98, %s112
      %p114 = scmp.eq.s32.totalorder %s25, 0
      %p115 = por %p113, %p114
      %s117 = sadd.s32 %s116, 1
      %p120 = scmp.eq.s32.totalorder %s19, 1
      %p121 = scmp.ne.s32.totalorder %s116, %s118
      %p122 = scmp.eq.s32.totalorder %s19, 0
      %p123 = por %p121, %p122
      %p124 = scmp.ne.s32.totalorder %s116, %s118
      %p125 = scmp.eq.s32.totalorder %s24, 1
      %p126 = por %p124, %p125
      %p127 = scmp.ne.s32.totalorder %s118, %s119
      %p128 = scmp.eq.s32.totalorder %s24, 0
      %p129 = por %p127, %p128
      %p130 = scmp.ne.s32.totalorder %s118, %s119
      %p131 = scmp.eq.s32.totalorder %s25, 1
      %p132 = por %p130, %p131
      %p134 = scmp.ne.s32.totalorder %s119, %s133
      %p135 = scmp.eq.s32.totalorder %s25, 0
      %p136 = por %p134, %p135
      %s138 = sadd.s32 %s137, 1
      %p141 = scmp.eq.s32.totalorder %s19, 1
      %p142 = scmp.ne.s32.totalorder %s137, %s139
      %p143 = scmp.eq.s32.totalorder %s19, 0
      %p144 = por %p142, %p143
      %p145 = scmp.ne.s32.totalorder %s137, %s139
      %p146 = scmp.eq.s32.totalorder %s24, 1
      %p147 = por %p145, %p146
      %p148 = scmp.ne.s32.totalorder %s139, %s140
      %p149 = scmp.eq.s32.totalorder %s24, 0
      %p150 = por %p148, %p149
      %p151 = scmp.ne.s32.totalorder %s139, %s140
      %p152 = scmp.eq.s32.totalorder %s25, 1
      %p153 = por %p151, %p152
      %p155 = scmp.ne.s32.totalorder %s140, %s154
      %p156 = scmp.eq.s32.totalorder %s25, 0
      %p157 = por %p155, %p156
      %s159 = sadd.s32 %s158, 1
      %p162 = scmp.eq.s32.totalorder %s19, 1
      %p163 = scmp.ne.s32.totalorder %s158, %s160
      %p164 = scmp.eq.s32.totalorder %s19, 0
      %p165 = por %p163, %p164
      %p166 = scmp.ne.s32.totalorder %s158, %s160
      %p167 = scmp.eq.s32.totalorder %s24, 1
      %p168 = por %p166, %p167
      %p169 = scmp.ne.s32.totalorder %s160, %s161
      %p170 = scmp.eq.s32.totalorder %s24, 0
      %p171 = por %p169, %p170
      %p172 = scmp.ne.s32.totalorder %s160, %s161
      %p173 = scmp.eq.s32.totalorder %s25, 1
      %p174 = por %p172, %p173
      %p176 = scmp.ne.s32.totalorder %s161, %s175
      %p177 = scmp.eq.s32.totalorder %s25, 0
      %p178 = por %p176, %p177
      %s180 = sadd.s32 %s179, 1
      %p183 = scmp.eq.s32.totalorder %s19, 1
      %p184 = scmp.ne.s32.totalorder %s179, %s181
      %p185 = scmp.eq.s32.totalorder %s19, 0
      %p186 = por %p184, %p185
      %p187 = scmp.ne.s32.totalorder %s179, %s181
      %p188 = scmp.eq.s32.totalorder %s24, 1
      %p189 = por %p187, %p188
      %p190 = scmp.ne.s32.totalorder %s181, %s182
      %p191 = scmp.eq.s32.totalorder %s24, 0
      %p192 = por %p190, %p191
      %p193 = scmp.ne.s32.totalorder %s181, %s182
      %p194 = scmp.eq.s32.totalorder %s25, 1
      %p195 = por %p193, %p194
      %p197 = scmp.ne.s32.totalorder %s182, %s196
      %p198 = scmp.eq.s32.totalorder %s25, 0
      %p199 = por %p197, %p198
      %s201 = sadd.s32 %s200, 1
      %p204 = scmp.eq.s32.totalorder %s19, 1
      %p205 = scmp.ne.s32.totalorder %s200, %s202
      %p206 = scmp.eq.s32.totalorder %s19, 0
      %p207 = por %p205, %p206
      %p208 = scmp.ne.s32.totalorder %s200, %s202
      %p209 = scmp.eq.s32.totalorder %s24, 1
      %p210 = por %p208, %p209
      %p211 = scmp.ne.s32.totalorder %s202, %s203
      %p212 = scmp.eq.s32.totalorder %s24, 0
      %p213 = por %p211, %p212
      %p214 = scmp.ne.s32.totalorder %s202, %s203
      %p215 = scmp.eq.s32.totalorder %s25, 1
      %p216 = por %p214, %p215
      %p218 = scmp.ne.s32.totalorder %s203, %s217
      %p219 = scmp.eq.s32.totalorder %s25, 0
      %p220 = por %p218, %p219
      %s222 = sadd.s32 %s221, 1
      %p225 = scmp.eq.s32.totalorder %s19, 1
      %p226 = scmp.ne.s32.totalorder %s221, %s223
      %p227 = scmp.eq.s32.totalorder %s19, 0
      %p228 = por %p226, %p227
      %p229 = scmp.ne.s32.totalorder %s221, %s223
      %p230 = scmp.eq.s32.totalorder %s24, 1
      %p231 = por %p229, %p230
      %p232 = scmp.ne.s32.totalorder %s223, %s224
      %p233 = scmp.eq.s32.totalorder %s24, 0
      %p234 = por %p232, %p233
      %p235 = scmp.ne.s32.totalorder %s223, %s224
      %p236 = scmp.eq.s32.totalorder %s25, 1
      %p237 = por %p235, %p236
      %p239 = scmp.ne.s32.totalorder %s224, %s238
      %p240 = scmp.eq.s32.totalorder %s25, 0
      %p241 = por %p239, %p240
      %s242 = ssub.s32 %s19, %s26
      %p243 = scmp.eq.s32.totalorder %s242, 0
      %s245 = sadd.s32 %s244, 1
      %s246 = scalar_select %p243, %s244, %s245
      %p249 = pneg %p243
      %p250 = scmp.eq.s32.totalorder %s19, 1
      %p251 = por %p249, %p250
      %p252 = scmp.ne.s32.totalorder %s244, %s247
      %p253 = scmp.eq.s32.totalorder %s19, 0
      %p254 = por %p252, %p253
      %p255 = scmp.ne.s32.totalorder %s244, %s247
      %p256 = scmp.eq.s32.totalorder %s24, 1
      %p257 = por %p255, %p256
      %p258 = scmp.ne.s32.totalorder %s247, %s248
      %p259 = scmp.eq.s32.totalorder %s24, 0
      %p260 = por %p258, %p259
      %p261 = scmp.ne.s32.totalorder %s247, %s248
      %p262 = scmp.eq.s32.totalorder %s25, 1
      %p263 = por %p261, %p262
      %p265 = scmp.ne.s32.totalorder %s248, %s264
      %p266 = scmp.eq.s32.totalorder %s25, 0
      %p267 = por %p265, %p266
      %p268 = scmp.le.s32.totalorder 1, %s19
      %p269 = scmp.lt.s32.totalorder %s19, 3
      %p270 = pnand %p268, %p269
      %p271 = pneg %p270
      // Predicated region
      $region9: #{tpu_custom_call.1} parent=5 // pred_check
        _
      $region10: #{tpu_custom_call.1} parent=5 // pred_check_branch
        %273 = sbr.rel (%p270) target = $region12
      $region11: #{tpu_custom_call.1} parent=5 // pred_region
        %s274 = ssub.s32 %s19, 1
        // Predicated region
        $region13: #{tpu_custom_call.1} parent=11 // pred_check
          %p275 = pneg %p66
        $region14: #{tpu_custom_call.1} parent=11 // pred_check_branch
          %277 = sbr.rel (%p275) target = $region16
        $region15: #{tpu_custom_call.1} parent=11 // pred_region
          _
        $region16: #{tpu_custom_call.1} parent=11 // pred_fallthru
          _
        // Predicated region
        $region17: #{tpu_custom_call.1} parent=11 // pred_check
          %p278 = pneg %p87
        $region18: #{tpu_custom_call.1} parent=11 // pred_check_branch
          %280 = sbr.rel (%p278) target = $region20
        $region19: #{tpu_custom_call.1} parent=11 // pred_region
          _
        $region20: #{tpu_custom_call.1} parent=11 // pred_fallthru
          _
        // Predicated region
        $region21: #{tpu_custom_call.1} parent=11 // pred_check
          %p281 = pneg %p108
        $region22: #{tpu_custom_call.1} parent=11 // pred_check_branch
          %283 = sbr.rel (%p281) target = $region24
        $region23: #{tpu_custom_call.1} parent=11 // pred_region
          _
        $region24: #{tpu_custom_call.1} parent=11 // pred_fallthru
          _
        // Predicated region
        $region25: #{tpu_custom_call.1} parent=11 // pred_check
          %p284 = pneg %p129
        $region26: #{tpu_custom_call.1} parent=11 // pred_check_branch
          %286 = sbr.rel (%p284) target = $region28
        $region27: #{tpu_custom_call.1} parent=11 // pred_region
          _
        $region28: #{tpu_custom_call.1} parent=11 // pred_fallthru
          _
        // Predicated region
        $region29: #{tpu_custom_call.1} parent=11 // pred_check
          %p287 = pneg %p150
        $region30: #{tpu_custom_call.1} parent=11 // pred_check_branch
          %289 = sbr.rel (%p287) target = $region32
        $region31: #{tpu_custom_call.1} parent=11 // pred_region
          _
        $region32: #{tpu_custom_call.1} parent=11 // pred_fallthru
          _
        // Predicated region
        $region33: #{tpu_custom_call.1} parent=11 // pred_check
          %p290 = pneg %p171
        $region34: #{tpu_custom_call.1} parent=11 // pred_check_branch
          %292 = sbr.rel (%p290) target = $region36
        $region35: #{tpu_custom_call.1} parent=11 // pred_region
          _
        $region36: #{tpu_custom_call.1} parent=11 // pred_fallthru
          _
        // Predicated region
        $region37: #{tpu_custom_call.1} parent=11 // pred_check
          %p293 = pneg %p192
        $region38: #{tpu_custom_call.1} parent=11 // pred_check_branch
          %295 = sbr.rel (%p293) target = $region40
        $region39: #{tpu_custom_call.1} parent=11 // pred_region
          _
        $region40: #{tpu_custom_call.1} parent=11 // pred_fallthru
          _
        // Predicated region
        $region41: #{tpu_custom_call.1} parent=11 // pred_check
          %p296 = pneg %p213
        $region42: #{tpu_custom_call.1} parent=11 // pred_check_branch
          %298 = sbr.rel (%p296) target = $region44
        $region43: #{tpu_custom_call.1} parent=11 // pred_region
          _
        $region44: #{tpu_custom_call.1} parent=11 // pred_fallthru
          _
        // Predicated region
        $region45: #{tpu_custom_call.1} parent=11 // pred_check
          %p299 = pneg %p234
        $region46: #{tpu_custom_call.1} parent=11 // pred_check_branch
          %301 = sbr.rel (%p299) target = $region48
        $region47: #{tpu_custom_call.1} parent=11 // pred_region
          _
        $region48: #{tpu_custom_call.1} parent=11 // pred_fallthru
          _
      $region12: #{tpu_custom_call.1} parent=5 // pred_fallthru
        _
      %p302 = scmp.lt.s32.totalorder %s19, 2
      // Predicated region
      $region49: #{tpu_custom_call.1} parent=5 // pred_check
        %p303 = pneg %p302
      $region50: #{tpu_custom_call.1} parent=5 // pred_check_branch
        %305 = sbr.rel (%p303) target = $region52
      $region51: #{tpu_custom_call.1} parent=5 // pred_region
        // Predicated region
        $region53: #{tpu_custom_call.1} parent=51 // pred_check
          %p306 = pneg %p39
        $region54: #{tpu_custom_call.1} parent=51 // pred_check_branch
          %308 = sbr.rel (%p306) target = $region56
        $region55: #{tpu_custom_call.1} parent=51 // pred_region
          %s309 = smul.u32 4, %s19
          %p310 = scmp.lt.s32.totalorder %s309, 7
          %s311 = scalar_select %p310, %s309, 7
          %s312 = smul.addr %s311, 4
          %s313 = scalar_lea.vmem %s0, %s312
          %s314 = smul.u32 4, %s19
        $region56: #{tpu_custom_call.1} parent=51 // pred_fallthru
          _
      $region52: #{tpu_custom_call.1} parent=5 // pred_fallthru
        _
      %p315 = scmp.le.s32.totalorder 1, %s19
      %p316 = scmp.lt.s32.totalorder %s19, 3
      %p317 = pnand %p315, %p316
      %p318 = pneg %p317
      // Predicated region
      $region57: #{tpu_custom_call.1} parent=5 // pred_check
        _
      $region58: #{tpu_custom_call.1} parent=5 // pred_check_branch
        %320 = sbr.rel (%p317) target = $region60
      $region59: #{tpu_custom_call.1} parent=5 // pred_region
        %s321 = ssub.s32 %s19, 1
        %s322 = smul.u32 4, %s24
        %p323 = scmp.lt.s32.totalorder %s322, 7
        %s324 = scalar_select %p323, %s322, 7
        %s325 = smul.addr %s324, 4
        %s326 = scalar_lea.vmem %s0, %s325
        %p327 = pneg %p45
        %p328 = pneg %p42
        %p329 = pneg %p66
        %p330 = pneg %p63
        %p331 = pneg %p87
        %p332 = pneg %p84
        %p333 = pneg %p108
        %p334 = pneg %p105
        %p335 = pneg %p129
        %p336 = pneg %p126
        %p337 = pneg %p150
        %p338 = pneg %p147
        %p339 = pneg %p171
        %p340 = pneg %p168
        %p341 = pneg %p192
        %p342 = pneg %p189
        %p343 = pneg %p213
        %p344 = pneg %p210
        %p345 = pneg %p234
        %p346 = pneg %p231
        %p347 = pneg %p260
        %p348 = pneg %p257
        %s349 = sand.u32 %s247, 1
        %s350 = scalar_lea.sflag [#allocation3], %s349
        %s351 = sand.u32 %s247, 1
        %s352 = smul.addr %s351, 64
        %s353 = scalar_lea.vmem [#allocation2], %s352
        %s354 = smul.u32 4, %s24
        %p355 = scmp.lt.s32.totalorder %s354, 7
        %s356 = scalar_select %p355, %s354, 7
        %s357 = smul.addr %s356, 4
        %s358 = scalar_lea.vmem %s0, %s357
        %s359 = smul.u32 4, %s24
        %s360 = smul.u32 4, %s24
        %v362 = vlaneseq
        %v363 = vand.u32 %v362, 127
        %v364 = vadd.s32 %v363, 128
        %v365 = vadd.s32 %v363, 256
        %v366 = vadd.s32 %v363, 384
        %vm367 = vcmp.lt.s32.totalorder %v363, 0
        %v368 = vsub.s32 0, %v363
        %v369 = vsel %vm367, %v368, %v363
        %v370 = vshrl.u32 %v369, 4
        %v371 = vand.u32 %v369, 15
        %v372 = vsub.s32 0, %v371
        %v373 = vsel %vm367, %v372, %v371
        %vm374 = vcmp.lt.s32.totalorder %v364, 0
        %v375 = vsub.s32 0, %v364
        %v376 = vsel %vm374, %v375, %v364
        %v377 = vshrl.u32 %v376, 4
        %v378 = vand.u32 %v376, 15
        %v379 = vsub.s32 0, %v378
        %v380 = vsel %vm374, %v379, %v378
        %vm381 = vcmp.lt.s32.totalorder %v365, 0
        %v382 = vsub.s32 0, %v365
        %v383 = vsel %vm381, %v382, %v365
        %v384 = vshrl.u32 %v383, 4
        %v385 = vand.u32 %v383, 15
        %v386 = vsub.s32 0, %v385
        %v387 = vsel %vm381, %v386, %v385
        %vm388 = vcmp.lt.s32.totalorder %v366, 0
        %v389 = vsub.s32 0, %v366
        %v390 = vsel %vm388, %v389, %v366
        %v391 = vshrl.u32 %v390, 4
        %v392 = vand.u32 %v390, 15
        %v393 = vsub.s32 0, %v392
        %v394 = vsel %vm388, %v393, %v392
        %vm395 = vcmp.ne.s32.totalorder %v373, 0
        %vm396 = vcmp.ne.s32.totalorder %v380, 0
        %vm397 = vcmp.ne.s32.totalorder %v387, 0
        %vm398 = vcmp.ne.s32.totalorder %v394, 0
        %vm399 = vcmp.lt.s32.totalorder %v373, 0
        %vm400 = vcmp.lt.s32.totalorder %v380, 0
        %vm401 = vcmp.lt.s32.totalorder %v387, 0
        %vm402 = vcmp.lt.s32.totalorder %v394, 0
        %vm403 = vmand %vm399, %vm395
        %vm404 = vmand %vm400, %vm396
        %vm405 = vmand %vm401, %vm397
        %vm406 = vmand %vm402, %vm398
        %v407 = vadd.s32 %v373, 16
        %v408 = vadd.s32 %v380, 16
        %v409 = vadd.s32 %v387, 16
        %v410 = vadd.s32 %v394, 16
        %v411 = vsel %vm403, %v407, %v373
        %v412 = vsel %vm404, %v408, %v380
        %v413 = vsel %vm405, %v409, %v387
        %v414 = vsel %vm406, %v410, %v394
        %v415 = vld [vmem:[%s358] sm:$0xff]
        %v416 = vld [vmem:[%s358 + $0x8] sm:$0xff]
        %v417 = vunpack.c.l.bf16 %v415
        %v418 = vunpack.c.h.bf16 %v415
        %v419 = vunpack.c.l.bf16 %v416
        %v420 = vunpack.c.h.bf16 %v416
        %421 = vrot.lane.b32.xlu0 %v417, 2
        %v422 = vpop.permute.xlu0 %421
        %423 = vrot.lane.b32.xlu0 %v418, 2
        %v424 = vpop.permute.xlu0 %423
        %425 = vrot.lane.b32.xlu0 %v419, 2
        %v426 = vpop.permute.xlu0 %425
        %427 = vrot.lane.b32.xlu0 %v420, 2
        %v428 = vpop.permute.xlu0 %427
        %vm429 = vcmp.lt.s32.totalorder %v363, 2
        %v430 = vsel %vm429, %v426, %v428
        %v431 = vsel %vm429, %v424, %v426
        %v432 = vsel %vm429, %v422, %v424
        %v433 = vsel %vm429, %v428, %v422
        %vm434 = vcmp.lt.s32.totalorder %v411, 2
        %vm435 = vcmp.lt.s32.totalorder %v412, 2
        %vm436 = vcmp.lt.s32.totalorder %v413, 2
        %vm437 = vcmp.lt.s32.totalorder %v414, 2
        %v438 = vsel %vm434, 1, 0
        %v439 = vsel %vm435, 1, 0
        %v440 = vsel %vm436, 1, 0
        %v441 = vsel %vm437, 1, 0
        %vm442 = vcmp.eq.s32.totalorder %v438, 1
        %vm443 = vcmp.eq.s32.totalorder %v439, 1
        %vm444 = vcmp.eq.s32.totalorder %v440, 1
        %vm445 = vcmp.eq.s32.totalorder %v441, 1
        %v446 = vsel %vm442, 0.0, %v433
        %v447 = vsel %vm443, 0.0, %v432
        %v448 = vsel %vm444, 0.0, %v431
        %v449 = vsel %vm445, 0.0, %v430
        %450 = vrot.lane.b32.xlu0 %v417, 1
        %v451 = vpop.permute.xlu0 %450
        %452 = vrot.lane.b32.xlu0 %v418, 1
        %v453 = vpop.permute.xlu0 %452
        %454 = vrot.lane.b32.xlu0 %v419, 1
        %v455 = vpop.permute.xlu0 %454
        %456 = vrot.lane.b32.xlu0 %v420, 1
        %v457 = vpop.permute.xlu0 %456
        %vm458 = vcmp.lt.s32.totalorder %v363, 1
        %v459 = vsel %vm458, %v455, %v457
        %v460 = vsel %vm458, %v453, %v455
        %v461 = vsel %vm458, %v451, %v453
        %v462 = vsel %vm458, %v457, %v451
        %vm463 = vcmp.lt.s32.totalorder %v411, 1
        %vm464 = vcmp.lt.s32.totalorder %v412, 1
        %vm465 = vcmp.lt.s32.totalorder %v413, 1
        %vm466 = vcmp.lt.s32.totalorder %v414, 1
        %v467 = vsel %vm463, 1, 0
        %v468 = vsel %vm464, 1, 0
        %v469 = vsel %vm465, 1, 0
        %v470 = vsel %vm466, 1, 0
        %vm471 = vcmp.eq.s32.totalorder %v467, 1
        %vm472 = vcmp.eq.s32.totalorder %v468, 1
        %vm473 = vcmp.eq.s32.totalorder %v469, 1
        %vm474 = vcmp.eq.s32.totalorder %v470, 1
        %v475 = vsel %vm471, 0.0, %v462
        %v476 = vsel %vm472, 0.0, %v461
        %v477 = vsel %vm473, 0.0, %v460
        %v478 = vsel %vm474, 0.0, %v459
        %v479 = vpack.c.bf16 %v475, %v446
        %v480 = vpack.c.bf16 %v476, %v447
        %v481 = vpack.c.bf16 %v477, %v448
        %v482 = vpack.c.bf16 %v478, %v449
        %v483 = vpack.c.bf16 %v417, %v417
        %v484 = vpack.c.bf16 %v418, %v418
        %v485 = vpack.c.bf16 %v419, %v419
        %v486 = vpack.c.bf16 %v420, %v420
        %v487 = vld [vmem:[%s1] sm:$0xf]
        %v488 = vld [vmem:[%s1 + $0x4] sm:$0xf]
        %v489 = vld [vmem:[%s1 + $0x8] sm:$0xf]
        %v490 = vld [vmem:[%s1 + $0xc] sm:$0xf]
        %v495 = vunpack.c.l.b16 %v487
        %v496 = vunpack.c.l.b16 %v488
        %v497 = vunpack.c.l.b16 %v489
        %v498 = vunpack.c.l.b16 %v490
        %v499 = vpack.c.b16 %v496, %v495
        %v500 = vpack.c.b16 %v498, %v497
        %vm501 = vcmask 195584
        %v503 = vsel %vm501, %v499, 0
        %v506 = vsel %vm501, %v500, 0
        %vm508 = vcmask 1043456
        %v510 = vsel %vm508, %v483, 0
        %v513 = vsel %vm508, %v484, 0
        %v516 = vsel %vm508, %v485, 0
        %v519 = vsel %vm508, %v486, 0
        %521 = vmatprep.subr.bf16.mxu0 %v480
        %522 = vmatpush1.bf16.msra.mxu0 %v479
        %523 = vmatprep.subr.bf16.mxu0 %v513
        %524 = vmatpush1.bf16.msra.mxu0 %v510
        %525 = vmatprep.subr.bf16.mxu0 0
        %526 = vmatpush1.bf16.msra.mxu0 0
        %527 = vmatprep.subr.bf16.mxu0 0
        %528 = vmatpush1.bf16.msra.mxu0 0
        %529 = vmatprep.subr.bf16.mxu0 0
        %530 = vmatpush1.bf16.msra.mxu0 0
        %531 = vmatprep.subr.bf16.mxu0 0
        %532 = vmatpush1.bf16.msra.mxu0 0
        %533 = vmatprep.subr.bf16.mxu0 0
        %534 = vmatpush1.bf16.msra.mxu0 0
        %535 = vmatprep.subr.bf16.mxu0 0
        %536 = vmatpush1.bf16.msra.mxu0 0
        %537 = vmatprep.subr.bf16.mxu0 0
        %538 = vmatpush1.bf16.msra.mxu0 0
        %539 = vmatprep.subr.bf16.mxu0 0
        %540 = vmatpush1.bf16.msra.mxu0 0
        %541 = vmatprep.subr.bf16.mxu0 0
        %542 = vmatpush1.bf16.msra.mxu0 0
        %543 = vmatprep.subr.bf16.mxu0 0
        %544 = vmatpush1.bf16.msra.mxu0 0
        %545 = vmatprep.subr.bf16.mxu0 0
        %546 = vmatpush1.bf16.msra.mxu0 0
        %547 = vmatprep.subr.bf16.mxu0 0
        %548 = vmatpush1.bf16.msra.mxu0 0
        %549 = vmatprep.subr.bf16.mxu0 0
        %550 = vmatpush1.bf16.msra.mxu0 0
        %551 = vmatprep.subr.bf16.mxu0 0
        %552 = vmatpush1.bf16.msra.mxu0 0
        %553 = vmatprep.mubr.bf16.mxu0 0
        %554 = vmatmul.mubr.bf16.gmra.mrb[0].mxu0 %v503
        %v555 = vpop.f32.mrb[0].mxu0
        %v556 = vadd.f32 0.0, %v555
        %v557 = vpop.f32.mrb[0].mxu0
        %v558 = vadd.f32 0.0, %v557
        %v559 = vpop.f32.mrb[0].mxu0
        %v560 = vadd.f32 0.0, %v559
        %v561 = vpop.f32.mrb[0].mxu0
        %v562 = vadd.f32 0.0, %v561
        %563 = vmatprep.mubr.bf16.mxu0 0
        %564 = vmatmul.mubr.bf16.gmra.mrb[0].mxu0 %v506
        %v565 = vpop.f32.mrb[0].mxu0
        %v566 = vadd.f32 0.0, %v565
        %v567 = vpop.f32.mrb[0].mxu0
        %v568 = vadd.f32 0.0, %v567
        %v569 = vpop.f32.mrb[0].mxu0
        %v570 = vadd.f32 0.0, %v569
        %v571 = vpop.f32.mrb[0].mxu0
        %v572 = vadd.f32 0.0, %v571
        %573 = vdwg.mxu0
        %574 = vmatprep.subr.bf16.mxu0 %v482
        %575 = vmatpush1.bf16.msra.mxu0 %v481
        %576 = vmatprep.subr.bf16.mxu0 %v519
        %577 = vmatpush1.bf16.msra.mxu0 %v516
        %578 = vmatprep.subr.bf16.mxu0 0
        %579 = vmatpush1.bf16.msra.mxu0 0
        %580 = vmatprep.subr.bf16.mxu0 0
        %581 = vmatpush1.bf16.msra.mxu0 0
        %582 = vmatprep.subr.bf16.mxu0 0
        %583 = vmatpush1.bf16.msra.mxu0 0
        %584 = vmatprep.subr.bf16.mxu0 0
        %585 = vmatpush1.bf16.msra.mxu0 0
        %586 = vmatprep.subr.bf16.mxu0 0
        %587 = vmatpush1.bf16.msra.mxu0 0
        %588 = vmatprep.subr.bf16.mxu0 0
        %589 = vmatpush1.bf16.msra.mxu0 0
        %590 = vmatprep.subr.bf16.mxu0 0
        %591 = vmatpush1.bf16.msra.mxu0 0
        %592 = vmatprep.subr.bf16.mxu0 0
        %593 = vmatpush1.bf16.msra.mxu0 0
        %594 = vmatprep.subr.bf16.mxu0 0
        %595 = vmatpush1.bf16.msra.mxu0 0
        %596 = vmatprep.subr.bf16.mxu0 0
        %597 = vmatpush1.bf16.msra.mxu0 0
        %598 = vmatprep.subr.bf16.mxu0 0
        %599 = vmatpush1.bf16.msra.mxu0 0
        %600 = vmatprep.subr.bf16.mxu0 0
        %601 = vmatpush1.bf16.msra.mxu0 0
        %602 = vmatprep.subr.bf16.mxu0 0
        %603 = vmatpush1.bf16.msra.mxu0 0
        %604 = vmatprep.subr.bf16.mxu0 0
        %605 = vmatpush1.bf16.msra.mxu0 0
        %606 = vmatprep.mubr.bf16.mxu0 0
        %607 = vmatmul.mubr.bf16.gmra.mrb[0].mxu0 %v503
        %v608 = vpop.f32.mrb[0].mxu0
        %v609 = vadd.f32 0.0, %v608
        %v610 = vpop.f32.mrb[0].mxu0
        %v611 = vadd.f32 0.0, %v610
        %v612 = vpop.f32.mrb[0].mxu0
        %v613 = vadd.f32 0.0, %v612
        %v614 = vpop.f32.mrb[0].mxu0
        %v615 = vadd.f32 0.0, %v614
        %616 = vmatprep.mubr.bf16.mxu0 0
        %617 = vmatmul.mubr.bf16.gmra.mrb[0].mxu0 %v506
        %v618 = vpop.f32.mrb[0].mxu0
        %v619 = vadd.f32 0.0, %v618
        %v620 = vpop.f32.mrb[0].mxu0
        %v621 = vadd.f32 0.0, %v620
        %v622 = vpop.f32.mrb[0].mxu0
        %v623 = vadd.f32 0.0, %v622
        %v624 = vpop.f32.mrb[0].mxu0
        %v625 = vadd.f32 0.0, %v624
        %626 = vdwg.mxu0
        %v627 = vld [vmem:[%s2] sm:$0xff]
        %v628 = vld [vmem:[%s2 + $0x8] sm:$0xff]
        %630 = vset.pattern.permute.xlu0 0
        %631 = vperm.xlu0 %630, %v627
        %v632 = vpop.permute.xlu0 %631
        %635 = vset.pattern.permute.xlu0 0
        %636 = vperm.xlu0 %635, %v628
        %v637 = vpop.permute.xlu0 %636
        %v639 = vadd.f32 %v556, %v632
        %v640 = vadd.f32 %v558, %v632
        %v641 = vadd.f32 %v609, %v632
        %v642 = vadd.f32 %v611, %v632
        %v643 = vadd.f32 %v560, %v637
        %v644 = vadd.f32 %v562, %v637
        %v645 = vadd.f32 %v613, %v637
        %v646 = vadd.f32 %v615, %v637
        %v647 = vmax.f32 %v639, 0.0
        %v648 = vmax.f32 %v640, 0.0
        %v649 = vmax.f32 %v641, 0.0
        %v650 = vmax.f32 %v642, 0.0
        %v651 = vmax.f32 %v643, 0.0
        %v652 = vmax.f32 %v644, 0.0
        %v653 = vmax.f32 %v645, 0.0
        %v654 = vmax.f32 %v646, 0.0
        %v655 = vld [vmem:[%s3] sm:$0xff]
        %v656 = vld [vmem:[%s3 + $0x8] sm:$0xff]
        %658 = vset.pattern.permute.xlu0 0
        %659 = vperm.xlu0 %658, %v655
        %v660 = vpop.permute.xlu0 %659
        %663 = vset.pattern.permute.xlu0 0
        %664 = vperm.xlu0 %663, %v656
        %v665 = vpop.permute.xlu0 %664
        %v667 = vadd.f32 %v566, %v660
        %v668 = vadd.f32 %v568, %v660
        %v669 = vadd.f32 %v619, %v660
        %v670 = vadd.f32 %v621, %v660
        %v671 = vadd.f32 %v570, %v665
        %v672 = vadd.f32 %v572, %v665
        %v673 = vadd.f32 %v623, %v665
        %v674 = vadd.f32 %v625, %v665
        %675 = vrot.lane.b32.xlu0 %v647, 2
        %v676 = vpop.permute.xlu0 %675
        %677 = vrot.lane.b32.xlu0 %v651, 2
        %v678 = vpop.permute.xlu0 %677
        %679 = vrot.lane.b32.xlu0 %v648, 2
        %v680 = vpop.permute.xlu0 %679
        %681 = vrot.lane.b32.xlu0 %v652, 2
        %v682 = vpop.permute.xlu0 %681
        %683 = vrot.lane.b32.xlu0 %v649, 2
        %v684 = vpop.permute.xlu0 %683
        %685 = vrot.lane.b32.xlu0 %v653, 2
        %v686 = vpop.permute.xlu0 %685
        %687 = vrot.lane.b32.xlu0 %v650, 2
        %v688 = vpop.permute.xlu0 %687
        %689 = vrot.lane.b32.xlu0 %v654, 2
        %v690 = vpop.permute.xlu0 %689
        %v691 = vsel %vm429, %v684, %v688
        %v692 = vsel %vm429, %v686, %v690
        %v693 = vsel %vm429, %v680, %v684
        %v694 = vsel %vm429, %v682, %v686
        %v695 = vsel %vm429, %v676, %v680
        %v696 = vsel %vm429, %v678, %v682
        %v697 = vsel %vm429, %v688, %v676
        %v698 = vsel %vm429, %v690, %v678
        %v699 = vsel %vm442, 0.0, %v697
        %v700 = vsel %vm443, 0.0, %v695
        %v701 = vsel %vm444, 0.0, %v693
        %v702 = vsel %vm445, 0.0, %v691
        %v703 = vsel %vm442, 0.0, %v698
        %v704 = vsel %vm443, 0.0, %v696
        %v705 = vsel %vm444, 0.0, %v694
        %v706 = vsel %vm445, 0.0, %v692
        %707 = vrot.lane.b32.xlu0 %v647, 1
        %v708 = vpop.permute.xlu0 %707
        %709 = vrot.lane.b32.xlu0 %v651, 1
        %v710 = vpop.permute.xlu0 %709
        %711 = vrot.lane.b32.xlu0 %v648, 1
        %v712 = vpop.permute.xlu0 %711
        %713 = vrot.lane.b32.xlu0 %v652, 1
        %v714 = vpop.permute.xlu0 %713
        %715 = vrot.lane.b32.xlu0 %v649, 1
        %v716 = vpop.permute.xlu0 %715
        %717 = vrot.lane.b32.xlu0 %v653, 1
        %v718 = vpop.permute.xlu0 %717
        %719 = vrot.lane.b32.xlu0 %v650, 1
        %v720 = vpop.permute.xlu0 %719
        %721 = vrot.lane.b32.xlu0 %v654, 1
        %v722 = vpop.permute.xlu0 %721
        %v723 = vsel %vm458, %v716, %v720
        %v724 = vsel %vm458, %v718, %v722
        %v725 = vsel %vm458, %v712, %v716
        %v726 = vsel %vm458, %v714, %v718
        %v727 = vsel %vm458, %v708, %v712
        %v728 = vsel %vm458, %v710, %v714
        %v729 = vsel %vm458, %v720, %v708
        %v730 = vsel %vm458, %v722, %v710
        %v731 = vsel %vm471, 0.0, %v729
        %v732 = vsel %vm472, 0.0, %v727
        %v733 = vsel %vm473, 0.0, %v725
        %v734 = vsel %vm474, 0.0, %v723
        %v735 = vsel %vm471, 0.0, %v730
        %v736 = vsel %vm472, 0.0, %v728
        %v737 = vsel %vm473, 0.0, %v726
        %v738 = vsel %vm474, 0.0, %v724
        %v739 = vpack.c.bf16 %v703, %v699
        %v740 = vpack.c.bf16 %v704, %v700
        %v741 = vpack.c.bf16 %v705, %v701
        %v742 = vpack.c.bf16 %v706, %v702
        %v743 = vpack.c.bf16 %v735, %v731
        %v744 = vpack.c.bf16 %v736, %v732
        %v745 = vpack.c.bf16 %v737, %v733
        %v746 = vpack.c.bf16 %v738, %v734
        %v747 = vpack.c.bf16 %v651, %v647
        %v748 = vpack.c.bf16 %v652, %v648
        %v749 = vpack.c.bf16 %v653, %v649
        %v750 = vpack.c.bf16 %v654, %v650
        %v751 = vld [vmem:[%s4] sm:$0xf]
        %v752 = vld [vmem:[%s4 + $0x4] sm:$0xf]
        %v753 = vld [vmem:[%s5] sm:$0xff]
        %v754 = vld [vmem:[%s5 + $0x8] sm:$0xff]
        %756 = vset.pattern.permute.xlu0 0
        %757 = vperm.xlu0 %756, %v753
        %v758 = vpop.permute.xlu0 %757
        %761 = vset.pattern.permute.xlu0 0
        %762 = vperm.xlu0 %761, %v754
        %v763 = vpop.permute.xlu0 %762
        %v767 = vunpack.c.l.b16 %v751
        %v768 = vunpack.c.l.b16 %v752
        %v769 = vpack.c.b16 %v768, %v767
        %vm770 = vcmask 392192
        %v772 = vsel %vm770, %v769, 0
        %774 = vmatprep.subr.bf16.mxu0 %v740
        %775 = vmatpush1.bf16.msra.mxu0 %v739
        %776 = vmatprep.subr.bf16.mxu0 %v744
        %777 = vmatpush1.bf16.msra.mxu0 %v743
        %778 = vmatprep.subr.bf16.mxu0 %v748
        %779 = vmatpush1.bf16.msra.mxu0 %v747
        %780 = vmatprep.subr.bf16.mxu0 0
        %781 = vmatpush1.bf16.msra.mxu0 0
        %782 = vmatprep.subr.bf16.mxu0 0
        %783 = vmatpush1.bf16.msra.mxu0 0
        %784 = vmatprep.subr.bf16.mxu0 0
        %785 = vmatpush1.bf16.msra.mxu0 0
        %786 = vmatprep.subr.bf16.mxu0 0
        %787 = vmatpush1.bf16.msra.mxu0 0
        %788 = vmatprep.subr.bf16.mxu0 0
        %789 = vmatpush1.bf16.msra.mxu0 0
        %790 = vmatprep.subr.bf16.mxu0 0
        %791 = vmatpush1.bf16.msra.mxu0 0
        %792 = vmatprep.subr.bf16.mxu0 0
        %793 = vmatpush1.bf16.msra.mxu0 0
        %794 = vmatprep.subr.bf16.mxu0 0
        %795 = vmatpush1.bf16.msra.mxu0 0
        %796 = vmatprep.subr.bf16.mxu0 0
        %797 = vmatpush1.bf16.msra.mxu0 0
        %798 = vmatprep.subr.bf16.mxu0 0
        %799 = vmatpush1.bf16.msra.mxu0 0
        %800 = vmatprep.subr.bf16.mxu0 0
        %801 = vmatpush1.bf16.msra.mxu0 0
        %802 = vmatprep.subr.bf16.mxu0 0
        %803 = vmatpush1.bf16.msra.mxu0 0
        %804 = vmatprep.subr.bf16.mxu0 0
        %805 = vmatpush1.bf16.msra.mxu0 0
        %806 = vmatprep.mubr.bf16.mxu0 0
        %807 = vmatmul.mubr.bf16.gmra.mrb[0].mxu0 %v772
        %v808 = vpop.f32.mrb[0].mxu0
        %v809 = vadd.f32 %v758, %v808
        %v810 = vpop.f32.mrb[0].mxu0
        %v811 = vadd.f32 %v758, %v810
        %v812 = vpop.f32.mrb[0].mxu0
        %v813 = vadd.f32 %v763, %v812
        %v814 = vpop.f32.mrb[0].mxu0
        %v815 = vadd.f32 %v763, %v814
        %816 = vdwg.mxu0
        %817 = vmatprep.subr.bf16.mxu0 %v742
        %818 = vmatpush1.bf16.msra.mxu0 %v741
        %819 = vmatprep.subr.bf16.mxu0 %v746
        %820 = vmatpush1.bf16.msra.mxu0 %v745
        %821 = vmatprep.subr.bf16.mxu0 %v750
        %822 = vmatpush1.bf16.msra.mxu0 %v749
        %823 = vmatprep.subr.bf16.mxu0 0
        %824 = vmatpush1.bf16.msra.mxu0 0
        %825 = vmatprep.subr.bf16.mxu0 0
        %826 = vmatpush1.bf16.msra.mxu0 0
        %827 = vmatprep.subr.bf16.mxu0 0
        %828 = vmatpush1.bf16.msra.mxu0 0
        %829 = vmatprep.subr.bf16.mxu0 0
        %830 = vmatpush1.bf16.msra.mxu0 0
        %831 = vmatprep.subr.bf16.mxu0 0
        %832 = vmatpush1.bf16.msra.mxu0 0
        %833 = vmatprep.subr.bf16.mxu0 0
        %834 = vmatpush1.bf16.msra.mxu0 0
        %835 = vmatprep.subr.bf16.mxu0 0
        %836 = vmatpush1.bf16.msra.mxu0 0
        %837 = vmatprep.subr.bf16.mxu0 0
        %838 = vmatpush1.bf16.msra.mxu0 0
        %839 = vmatprep.subr.bf16.mxu0 0
        %840 = vmatpush1.bf16.msra.mxu0 0
        %841 = vmatprep.subr.bf16.mxu0 0
        %842 = vmatpush1.bf16.msra.mxu0 0
        %843 = vmatprep.subr.bf16.mxu0 0
        %844 = vmatpush1.bf16.msra.mxu0 0
        %845 = vmatprep.subr.bf16.mxu0 0
        %846 = vmatpush1.bf16.msra.mxu0 0
        %847 = vmatprep.subr.bf16.mxu0 0
        %848 = vmatpush1.bf16.msra.mxu0 0
        %849 = vmatprep.mubr.bf16.mxu0 0
        %850 = vmatmul.mubr.bf16.gmra.mrb[0].mxu0 %v772
        %v851 = vpop.f32.mrb[0].mxu0
        %v852 = vadd.f32 %v758, %v851
        %v853 = vpop.f32.mrb[0].mxu0
        %v854 = vadd.f32 %v758, %v853
        %v855 = vpop.f32.mrb[0].mxu0
        %v856 = vadd.f32 %v763, %v855
        %v857 = vpop.f32.mrb[0].mxu0
        %v858 = vadd.f32 %v763, %v857
        %859 = vdwg.mxu0
        %v860 = vmax.f32 %v809, 0.0
        %v861 = vmax.f32 %v811, 0.0
        %v862 = vmax.f32 %v852, 0.0
        %v863 = vmax.f32 %v854, 0.0
        %v864 = vmax.f32 %v813, 0.0
        %v865 = vmax.f32 %v815, 0.0
        %v866 = vmax.f32 %v856, 0.0
        %v867 = vmax.f32 %v858, 0.0
        %v868 = vadd.f32 %v860, %v667
        %v869 = vadd.f32 %v861, %v668
        %v870 = vadd.f32 %v862, %v669
        %v871 = vadd.f32 %v863, %v670
        %v872 = vadd.f32 %v864, %v671
        %v873 = vadd.f32 %v865, %v672
        %v874 = vadd.f32 %v866, %v673
        %v875 = vadd.f32 %v867, %v674
        %v876 = vmax.f32 %v868, 0.0
        %v877 = vmax.f32 %v869, 0.0
        %v878 = vmax.f32 %v870, 0.0
        %v879 = vmax.f32 %v871, 0.0
        %v880 = vmax.f32 %v872, 0.0
        %v881 = vmax.f32 %v873, 0.0
        %v882 = vmax.f32 %v874, 0.0
        %v883 = vmax.f32 %v875, 0.0
        %v884 = vpack.c.bf16 %v880, %v876
        %v885 = vpack.c.bf16 %v881, %v877
        %v886 = vpack.c.bf16 %v882, %v878
        %v887 = vpack.c.bf16 %v883, %v879
        %v888 = vunpack.c.l.bf16 %v884
        %v889 = vunpack.c.l.bf16 %v885
        %v890 = vunpack.c.l.bf16 %v886
        %v891 = vunpack.c.l.bf16 %v887
        %v892 = vunpack.c.h.bf16 %v884
        %v893 = vunpack.c.h.bf16 %v885
        %v894 = vunpack.c.h.bf16 %v886
        %v895 = vunpack.c.h.bf16 %v887
        %896 = vrot.lane.b32.xlu0 %v888, 4
        %v897 = vpop.permute.xlu0 %896
        %898 = vrot.lane.b32.xlu0 %v892, 4
        %v899 = vpop.permute.xlu0 %898
        %900 = vrot.lane.b32.xlu0 %v889, 4
        %v901 = vpop.permute.xlu0 %900
        %902 = vrot.lane.b32.xlu0 %v893, 4
        %v903 = vpop.permute.xlu0 %902
        %904 = vrot.lane.b32.xlu0 %v890, 4
        %v905 = vpop.permute.xlu0 %904
        %906 = vrot.lane.b32.xlu0 %v894, 4
        %v907 = vpop.permute.xlu0 %906
        %908 = vrot.lane.b32.xlu0 %v891, 4
        %v909 = vpop.permute.xlu0 %908
        %910 = vrot.lane.b32.xlu0 %v895, 4
        %v911 = vpop.permute.xlu0 %910
        %vm912 = vcmp.lt.s32.totalorder %v363, 4
        %v913 = vsel %vm912, %v905, %v909
        %v914 = vsel %vm912, %v907, %v911
        %v915 = vsel %vm912, %v901, %v905
        %v916 = vsel %vm912, %v903, %v907
        %v917 = vsel %vm912, %v897, %v901
        %v918 = vsel %vm912, %v899, %v903
        %v919 = vsel %vm912, %v909, %v897
        %v920 = vsel %vm912, %v911, %v899
        %vm921 = vcmp.lt.s32.totalorder %v411, 4
        %vm922 = vcmp.lt.s32.totalorder %v412, 4
        %vm923 = vcmp.lt.s32.totalorder %v413, 4
        %vm924 = vcmp.lt.s32.totalorder %v414, 4
        %v925 = vsel %vm921, 1, 0
        %v926 = vsel %vm922, 1, 0
        %v927 = vsel %vm923, 1, 0
        %v928 = vsel %vm924, 1, 0
        %vm929 = vcmp.eq.s32.totalorder %v925, 1
        %vm930 = vcmp.eq.s32.totalorder %v926, 1
        %vm931 = vcmp.eq.s32.totalorder %v927, 1
        %vm932 = vcmp.eq.s32.totalorder %v928, 1
        %v933 = vsel %vm929, 0.0, %v919
        %v934 = vsel %vm930, 0.0, %v917
        %v935 = vsel %vm931, 0.0, %v915
        %v936 = vsel %vm932, 0.0, %v913
        %v937 = vsel %vm929, 0.0, %v920
        %v938 = vsel %vm930, 0.0, %v918
        %v939 = vsel %vm931, 0.0, %v916
        %v940 = vsel %vm932, 0.0, %v914
        %941 = vrot.lane.b32.xlu0 %v888, 2
        %v942 = vpop.permute.xlu0 %941
        %943 = vrot.lane.b32.xlu0 %v892, 2
        %v944 = vpop.permute.xlu0 %943
        %945 = vrot.lane.b32.xlu0 %v889, 2
        %v946 = vpop.permute.xlu0 %945
        %947 = vrot.lane.b32.xlu0 %v893, 2
        %v948 = vpop.permute.xlu0 %947
        %949 = vrot.lane.b32.xlu0 %v890, 2
        %v950 = vpop.permute.xlu0 %949
        %951 = vrot.lane.b32.xlu0 %v894, 2
        %v952 = vpop.permute.xlu0 %951
        %953 = vrot.lane.b32.xlu0 %v891, 2
        %v954 = vpop.permute.xlu0 %953
        %955 = vrot.lane.b32.xlu0 %v895, 2
        %v956 = vpop.permute.xlu0 %955
        %v957 = vsel %vm429, %v950, %v954
        %v958 = vsel %vm429, %v952, %v956
        %v959 = vsel %vm429, %v946, %v950
        %v960 = vsel %vm429, %v948, %v952
        %v961 = vsel %vm429, %v942, %v946
        %v962 = vsel %vm429, %v944, %v948
        %v963 = vsel %vm429, %v954, %v942
        %v964 = vsel %vm429, %v956, %v944
        %v965 = vsel %vm442, 0.0, %v963
        %v966 = vsel %vm443, 0.0, %v961
        %v967 = vsel %vm444, 0.0, %v959
        %v968 = vsel %vm445, 0.0, %v957
        %v969 = vsel %vm442, 0.0, %v964
        %v970 = vsel %vm443, 0.0, %v962
        %v971 = vsel %vm444, 0.0, %v960
        %v972 = vsel %vm445, 0.0, %v958
        %v973 = vpack.c.bf16 %v937, %v933
        %v974 = vpack.c.bf16 %v938, %v934
        %v975 = vpack.c.bf16 %v939, %v935
        %v976 = vpack.c.bf16 %v940, %v936
        %v977 = vpack.c.bf16 %v969, %v965
        %v978 = vpack.c.bf16 %v970, %v966
        %v979 = vpack.c.bf16 %v971, %v967
        %v980 = vpack.c.bf16 %v972, %v968
        %v981 = vpack.c.bf16 %v892, %v888
        %v982 = vpack.c.bf16 %v893, %v889
        %v983 = vpack.c.bf16 %v894, %v890
        %v984 = vpack.c.bf16 %v895, %v891
        %v985 = vld [vmem:[%s6] sm:$0xf]
        %v986 = vld [vmem:[%s6 + $0x4] sm:$0xf]
        %v987 = vld [vmem:[%s7] sm:$0xff]
        %v988 = vld [vmem:[%s7 + $0x8] sm:$0xff]
        %990 = vset.pattern.permute.xlu0 0
        %991 = vperm.xlu0 %990, %v987
        %v992 = vpop.permute.xlu0 %991
        %995 = vset.pattern.permute.xlu0 0
        %996 = vperm.xlu0 %995, %v988
        %v997 = vpop.permute.xlu0 %996
        %v1001 = vunpack.c.l.b16 %v985
        %v1002 = vunpack.c.l.b16 %v986
        %v1003 = vpack.c.b16 %v1002, %v1001
        %v1005 = vsel %vm770, %v1003, 0
        %1007 = vmatprep.subr.bf16.mxu0 %v974
        %1008 = vmatpush1.bf16.msra.mxu0 %v973
        %1009 = vmatprep.subr.bf16.mxu0 %v978
        %1010 = vmatpush1.bf16.msra.mxu0 %v977
        %1011 = vmatprep.subr.bf16.mxu0 %v982
        %1012 = vmatpush1.bf16.msra.mxu0 %v981
        %1013 = vmatprep.subr.bf16.mxu0 0
        %1014 = vmatpush1.bf16.msra.mxu0 0
        %1015 = vmatprep.subr.bf16.mxu0 0
        %1016 = vmatpush1.bf16.msra.mxu0 0
        %1017 = vmatprep.subr.bf16.mxu0 0
        %1018 = vmatpush1.bf16.msra.mxu0 0
        %1019 = vmatprep.subr.bf16.mxu0 0
        %1020 = vmatpush1.bf16.msra.mxu0 0
        %1021 = vmatprep.subr.bf16.mxu0 0
        %1022 = vmatpush1.bf16.msra.mxu0 0
        %1023 = vmatprep.subr.bf16.mxu0 0
        %1024 = vmatpush1.bf16.msra.mxu0 0
        %1025 = vmatprep.subr.bf16.mxu0 0
        %1026 = vmatpush1.bf16.msra.mxu0 0
        %1027 = vmatprep.subr.bf16.mxu0 0
        %1028 = vmatpush1.bf16.msra.mxu0 0
        %1029 = vmatprep.subr.bf16.mxu0 0
        %1030 = vmatpush1.bf16.msra.mxu0 0
        %1031 = vmatprep.subr.bf16.mxu0 0
        %1032 = vmatpush1.bf16.msra.mxu0 0
        %1033 = vmatprep.subr.bf16.mxu0 0
        %1034 = vmatpush1.bf16.msra.mxu0 0
        %1035 = vmatprep.subr.bf16.mxu0 0
        %1036 = vmatpush1.bf16.msra.mxu0 0
        %1037 = vmatprep.subr.bf16.mxu0 0
        %1038 = vmatpush1.bf16.msra.mxu0 0
        %1039 = vmatprep.mubr.bf16.mxu0 0
        %1040 = vmatmul.mubr.bf16.gmra.mrb[0].mxu0 %v1005
        %v1041 = vpop.f32.mrb[0].mxu0
        %v1042 = vadd.f32 %v992, %v1041
        %v1043 = vpop.f32.mrb[0].mxu0
        %v1044 = vadd.f32 %v992, %v1043
        %v1045 = vpop.f32.mrb[0].mxu0
        %v1046 = vadd.f32 %v997, %v1045
        %v1047 = vpop.f32.mrb[0].mxu0
        %v1048 = vadd.f32 %v997, %v1047
        %1049 = vdwg.mxu0
        %1050 = vmatprep.subr.bf16.mxu0 %v976
        %1051 = vmatpush1.bf16.msra.mxu0 %v975
        %1052 = vmatprep.subr.bf16.mxu0 %v980
        %1053 = vmatpush1.bf16.msra.mxu0 %v979
        %1054 = vmatprep.subr.bf16.mxu0 %v984
        %1055 = vmatpush1.bf16.msra.mxu0 %v983
        %1056 = vmatprep.subr.bf16.mxu0 0
        %1057 = vmatpush1.bf16.msra.mxu0 0
        %1058 = vmatprep.subr.bf16.mxu0 0
        %1059 = vmatpush1.bf16.msra.mxu0 0
        %1060 = vmatprep.subr.bf16.mxu0 0
        %1061 = vmatpush1.bf16.msra.mxu0 0
        %1062 = vmatprep.subr.bf16.mxu0 0
        %1063 = vmatpush1.bf16.msra.mxu0 0
        %1064 = vmatprep.subr.bf16.mxu0 0
        %1065 = vmatpush1.bf16.msra.mxu0 0
        %1066 = vmatprep.subr.bf16.mxu0 0
        %1067 = vmatpush1.bf16.msra.mxu0 0
        %1068 = vmatprep.subr.bf16.mxu0 0
        %1069 = vmatpush1.bf16.msra.mxu0 0
        %1070 = vmatprep.subr.bf16.mxu0 0
        %1071 = vmatpush1.bf16.msra.mxu0 0
        %1072 = vmatprep.subr.bf16.mxu0 0
        %1073 = vmatpush1.bf16.msra.mxu0 0
        %1074 = vmatprep.subr.bf16.mxu0 0
        %1075 = vmatpush1.bf16.msra.mxu0 0
        %1076 = vmatprep.subr.bf16.mxu0 0
        %1077 = vmatpush1.bf16.msra.mxu0 0
        %1078 = vmatprep.subr.bf16.mxu0 0
        %1079 = vmatpush1.bf16.msra.mxu0 0
        %1080 = vmatprep.subr.bf16.mxu0 0
        %1081 = vmatpush1.bf16.msra.mxu0 0
        %1082 = vmatprep.mubr.bf16.mxu0 0
        %1083 = vmatmul.mubr.bf16.gmra.mrb[0].mxu0 %v1005
        %v1084 = vpop.f32.mrb[0].mxu0
        %v1085 = vadd.f32 %v992, %v1084
        %v1086 = vpop.f32.mrb[0].mxu0
        %v1087 = vadd.f32 %v992, %v1086
        %v1088 = vpop.f32.mrb[0].mxu0
        %v1089 = vadd.f32 %v997, %v1088
        %v1090 = vpop.f32.mrb[0].mxu0
        %v1091 = vadd.f32 %v997, %v1090
        %1092 = vdwg.mxu0
        %v1093 = vmax.f32 %v1042, 0.0
        %v1094 = vmax.f32 %v1044, 0.0
        %v1095 = vmax.f32 %v1085, 0.0
        %v1096 = vmax.f32 %v1087, 0.0
        %v1097 = vmax.f32 %v1046, 0.0
        %v1098 = vmax.f32 %v1048, 0.0
        %v1099 = vmax.f32 %v1089, 0.0
        %v1100 = vmax.f32 %v1091, 0.0
        %1101 = vrot.lane.b32.xlu0 %v1093, 4
        %v1102 = vpop.permute.xlu0 %1101
        %1103 = vrot.lane.b32.xlu0 %v1097, 4
        %v1104 = vpop.permute.xlu0 %1103
        %1105 = vrot.lane.b32.xlu0 %v1094, 4
        %v1106 = vpop.permute.xlu0 %1105
        %1107 = vrot.lane.b32.xlu0 %v1098, 4
        %v1108 = vpop.permute.xlu0 %1107
        %1109 = vrot.lane.b32.xlu0 %v1095, 4
        %v1110 = vpop.permute.xlu0 %1109
        %1111 = vrot.lane.b32.xlu0 %v1099, 4
        %v1112 = vpop.permute.xlu0 %1111
        %1113 = vrot.lane.b32.xlu0 %v1096, 4
        %v1114 = vpop.permute.xlu0 %1113
        %1115 = vrot.lane.b32.xlu0 %v1100, 4
        %v1116 = vpop.permute.xlu0 %1115
        %v1117 = vsel %vm912, %v1110, %v1114
        %v1118 = vsel %vm912, %v1112, %v1116
        %v1119 = vsel %vm912, %v1106, %v1110
        %v1120 = vsel %vm912, %v1108, %v1112
        %v1121 = vsel %vm912, %v1102, %v1106
        %v1122 = vsel %vm912, %v1104, %v1108
        %v1123 = vsel %vm912, %v1114, %v1102
        %v1124 = vsel %vm912, %v1116, %v1104
        %v1125 = vsel %vm929, 0.0, %v1123
        %v1126 = vsel %vm930, 0.0, %v1121
        %v1127 = vsel %vm931, 0.0, %v1119
        %v1128 = vsel %vm932, 0.0, %v1117
        %v1129 = vsel %vm929, 0.0, %v1124
        %v1130 = vsel %vm930, 0.0, %v1122
        %v1131 = vsel %vm931, 0.0, %v1120
        %v1132 = vsel %vm932, 0.0, %v1118
        %1133 = vrot.lane.b32.xlu0 %v1093, 2
        %v1134 = vpop.permute.xlu0 %1133
        %1135 = vrot.lane.b32.xlu0 %v1097, 2
        %v1136 = vpop.permute.xlu0 %1135
        %1137 = vrot.lane.b32.xlu0 %v1094, 2
        %v1138 = vpop.permute.xlu0 %1137
        %1139 = vrot.lane.b32.xlu0 %v1098, 2
        %v1140 = vpop.permute.xlu0 %1139
        %1141 = vrot.lane.b32.xlu0 %v1095, 2
        %v1142 = vpop.permute.xlu0 %1141
        %1143 = vrot.lane.b32.xlu0 %v1099, 2
        %v1144 = vpop.permute.xlu0 %1143
        %1145 = vrot.lane.b32.xlu0 %v1096, 2
        %v1146 = vpop.permute.xlu0 %1145
        %1147 = vrot.lane.b32.xlu0 %v1100, 2
        %v1148 = vpop.permute.xlu0 %1147
        %v1149 = vsel %vm429, %v1142, %v1146
        %v1150 = vsel %vm429, %v1144, %v1148
        %v1151 = vsel %vm429, %v1138, %v1142
        %v1152 = vsel %vm429, %v1140, %v1144
        %v1153 = vsel %vm429, %v1134, %v1138
        %v1154 = vsel %vm429, %v1136, %v1140
        %v1155 = vsel %vm429, %v1146, %v1134
        %v1156 = vsel %vm429, %v1148, %v1136
        %v1157 = vsel %vm442, 0.0, %v1155
        %v1158 = vsel %vm443, 0.0, %v1153
        %v1159 = vsel %vm444, 0.0, %v1151
        %v1160 = vsel %vm445, 0.0, %v1149
        %v1161 = vsel %vm442, 0.0, %v1156
        %v1162 = vsel %vm443, 0.0, %v1154
        %v1163 = vsel %vm444, 0.0, %v1152
        %v1164 = vsel %vm445, 0.0, %v1150
        %v1165 = vpack.c.bf16 %v1129, %v1125
        %v1166 = vpack.c.bf16 %v1130, %v1126
        %v1167 = vpack.c.bf16 %v1131, %v1127
        %v1168 = vpack.c.bf16 %v1132, %v1128
        %v1169 = vpack.c.bf16 %v1161, %v1157
        %v1170 = vpack.c.bf16 %v1162, %v1158
        %v1171 = vpack.c.bf16 %v1163, %v1159
        %v1172 = vpack.c.bf16 %v1164, %v1160
        %v1173 = vpack.c.bf16 %v1097, %v1093
        %v1174 = vpack.c.bf16 %v1098, %v1094
        %v1175 = vpack.c.bf16 %v1099, %v1095
        %v1176 = vpack.c.bf16 %v1100, %v1096
        %v1177 = vld [vmem:[%s8] sm:$0xf]
        %v1178 = vld [vmem:[%s8 + $0x4] sm:$0xf]
        %v1179 = vld [vmem:[%s9] sm:$0xff]
        %v1180 = vld [vmem:[%s9 + $0x8] sm:$0xff]
        %1182 = vset.pattern.permute.xlu0 0
        %1183 = vperm.xlu0 %1182, %v1179
        %v1184 = vpop.permute.xlu0 %1183
        %1187 = vset.pattern.permute.xlu0 0
        %1188 = vperm.xlu0 %1187, %v1180
        %v1189 = vpop.permute.xlu0 %1188
        %v1193 = vunpack.c.l.b16 %v1177
        %v1194 = vunpack.c.l.b16 %v1178
        %v1195 = vpack.c.b16 %v1194, %v1193
        %v1197 = vsel %vm770, %v1195, 0
        %1199 = vmatprep.subr.bf16.mxu0 %v1166
        %1200 = vmatpush1.bf16.msra.mxu0 %v1165
        %1201 = vmatprep.subr.bf16.mxu0 %v1170
        %1202 = vmatpush1.bf16.msra.mxu0 %v1169
        %1203 = vmatprep.subr.bf16.mxu0 %v1174
        %1204 = vmatpush1.bf16.msra.mxu0 %v1173
        %1205 = vmatprep.subr.bf16.mxu0 0
        %1206 = vmatpush1.bf16.msra.mxu0 0
        %1207 = vmatprep.subr.bf16.mxu0 0
        %1208 = vmatpush1.bf16.msra.mxu0 0
        %1209 = vmatprep.subr.bf16.mxu0 0
        %1210 = vmatpush1.bf16.msra.mxu0 0
        %1211 = vmatprep.subr.bf16.mxu0 0
        %1212 = vmatpush1.bf16.msra.mxu0 0
        %1213 = vmatprep.subr.bf16.mxu0 0
        %1214 = vmatpush1.bf16.msra.mxu0 0
        %1215 = vmatprep.subr.bf16.mxu0 0
        %1216 = vmatpush1.bf16.msra.mxu0 0
        %1217 = vmatprep.subr.bf16.mxu0 0
        %1218 = vmatpush1.bf16.msra.mxu0 0
        %1219 = vmatprep.subr.bf16.mxu0 0
        %1220 = vmatpush1.bf16.msra.mxu0 0
        %1221 = vmatprep.subr.bf16.mxu0 0
        %1222 = vmatpush1.bf16.msra.mxu0 0
        %1223 = vmatprep.subr.bf16.mxu0 0
        %1224 = vmatpush1.bf16.msra.mxu0 0
        %1225 = vmatprep.subr.bf16.mxu0 0
        %1226 = vmatpush1.bf16.msra.mxu0 0
        %1227 = vmatprep.subr.bf16.mxu0 0
        %1228 = vmatpush1.bf16.msra.mxu0 0
        %1229 = vmatprep.subr.bf16.mxu0 0
        %1230 = vmatpush1.bf16.msra.mxu0 0
        %1231 = vmatprep.mubr.bf16.mxu0 0
        %1232 = vmatmul.mubr.bf16.gmra.mrb[0].mxu0 %v1197
        %v1233 = vpop.f32.mrb[0].mxu0
        %v1234 = vadd.f32 %v1184, %v1233
        %v1235 = vpop.f32.mrb[0].mxu0
        %v1236 = vadd.f32 %v1184, %v1235
        %v1237 = vpop.f32.mrb[0].mxu0
        %v1238 = vadd.f32 %v1189, %v1237
        %v1239 = vpop.f32.mrb[0].mxu0
        %v1240 = vadd.f32 %v1189, %v1239
        %1241 = vdwg.mxu0
        %1242 = vmatprep.subr.bf16.mxu0 %v1168
        %1243 = vmatpush1.bf16.msra.mxu0 %v1167
        %1244 = vmatprep.subr.bf16.mxu0 %v1172
        %1245 = vmatpush1.bf16.msra.mxu0 %v1171
        %1246 = vmatprep.subr.bf16.mxu0 %v1176
        %1247 = vmatpush1.bf16.msra.mxu0 %v1175
        %1248 = vmatprep.subr.bf16.mxu0 0
        %1249 = vmatpush1.bf16.msra.mxu0 0
        %1250 = vmatprep.subr.bf16.mxu0 0
        %1251 = vmatpush1.bf16.msra.mxu0 0
        %1252 = vmatprep.subr.bf16.mxu0 0
        %1253 = vmatpush1.bf16.msra.mxu0 0
        %1254 = vmatprep.subr.bf16.mxu0 0
        %1255 = vmatpush1.bf16.msra.mxu0 0
        %1256 = vmatprep.subr.bf16.mxu0 0
        %1257 = vmatpush1.bf16.msra.mxu0 0
        %1258 = vmatprep.subr.bf16.mxu0 0
        %1259 = vmatpush1.bf16.msra.mxu0 0
        %1260 = vmatprep.subr.bf16.mxu0 0
        %1261 = vmatpush1.bf16.msra.mxu0 0
        %1262 = vmatprep.subr.bf16.mxu0 0
        %1263 = vmatpush1.bf16.msra.mxu0 0
        %1264 = vmatprep.subr.bf16.mxu0 0
        %1265 = vmatpush1.bf16.msra.mxu0 0
        %1266 = vmatprep.subr.bf16.mxu0 0
        %1267 = vmatpush1.bf16.msra.mxu0 0
        %1268 = vmatprep.subr.bf16.mxu0 0
        %1269 = vmatpush1.bf16.msra.mxu0 0
        %1270 = vmatprep.subr.bf16.mxu0 0
        %1271 = vmatpush1.bf16.msra.mxu0 0
        %1272 = vmatprep.subr.bf16.mxu0 0
        %1273 = vmatpush1.bf16.msra.mxu0 0
        %1274 = vmatprep.mubr.bf16.mxu0 0
        %1275 = vmatmul.mubr.bf16.gmra.mrb[0].mxu0 %v1197
        %v1276 = vpop.f32.mrb[0].mxu0
        %v1277 = vadd.f32 %v1184, %v1276
        %v1278 = vpop.f32.mrb[0].mxu0
        %v1279 = vadd.f32 %v1184, %v1278
        %v1280 = vpop.f32.mrb[0].mxu0
        %v1281 = vadd.f32 %v1189, %v1280
        %v1282 = vpop.f32.mrb[0].mxu0
        %v1283 = vadd.f32 %v1189, %v1282
        %1284 = vdwg.mxu0
        %v1285 = vmax.f32 %v1234, 0.0
        %v1286 = vmax.f32 %v1236, 0.0
        %v1287 = vmax.f32 %v1277, 0.0
        %v1288 = vmax.f32 %v1279, 0.0
        %v1289 = vmax.f32 %v1238, 0.0
        %v1290 = vmax.f32 %v1240, 0.0
        %v1291 = vmax.f32 %v1281, 0.0
        %v1292 = vmax.f32 %v1283, 0.0
        %v1293 = vadd.f32 %v1285, %v888
        %v1294 = vadd.f32 %v1286, %v889
        %v1295 = vadd.f32 %v1287, %v890
        %v1296 = vadd.f32 %v1288, %v891
        %v1297 = vadd.f32 %v1289, %v892
        %v1298 = vadd.f32 %v1290, %v893
        %v1299 = vadd.f32 %v1291, %v894
        %v1300 = vadd.f32 %v1292, %v895
        %v1301 = vmax.f32 %v1293, 0.0
        %v1302 = vmax.f32 %v1294, 0.0
        %v1303 = vmax.f32 %v1295, 0.0
        %v1304 = vmax.f32 %v1296, 0.0
        %v1305 = vmax.f32 %v1297, 0.0
        %v1306 = vmax.f32 %v1298, 0.0
        %v1307 = vmax.f32 %v1299, 0.0
        %v1308 = vmax.f32 %v1300, 0.0
        %1309 = vst [vmem:[%s353] sm:$0xff] %v1301
        %1310 = vst [vmem:[%s353 + $0x8] sm:$0xff] %v1302
        %1311 = vst [vmem:[%s353 + $0x10] sm:$0xff] %v1303
        %1312 = vst [vmem:[%s353 + $0x18] sm:$0xff] %v1304
        %1313 = vst [vmem:[%s353 + $0x20] sm:$0xff] %v1305
        %1314 = vst [vmem:[%s353 + $0x28] sm:$0xff] %v1306
        %1315 = vst [vmem:[%s353 + $0x30] sm:$0xff] %v1307
        %1316 = vst [vmem:[%s353 + $0x38] sm:$0xff] %v1308
        %s1317 = sand.u32 %s247, 1
        %s1318 = scalar_lea.sflag [#allocation3], %s1317
        %s1319 = sand.u32 %s247, 1
        %s1320 = smul.addr %s1319, 64
        %s1321 = scalar_lea.vmem [#allocation2], %s1320
        // Predicated region
        $region61: #{tpu_custom_call.1} parent=59 // pred_check
          %p1322 = pneg %p257
        $region62: #{tpu_custom_call.1} parent=59 // pred_check_branch
          %1324 = sbr.rel (%p1322) target = $region64
        $region63: #{tpu_custom_call.1} parent=59 // pred_region
          %s1325 = smul.u32 4, %s24
          %s1327 = ssub.s32 1024, 1024
          %1328 = vsyncadd %s1318, %s1327
          %s1329 = smul.addr %s1325, 128
          %s1330 = scalar_lea.hbm %s10, %s1329
          %s1331 = sshll.u32 %s1321, 4
          %s1332 = int_to_ptr.vmem [resolvable:$true] %s1331
          %1337 = dma.vmem_to_hbm [thread:$0]  %s1332, 1024, %s1330, %s1318, 512, 1024, 32
        $region64: #{tpu_custom_call.1} parent=59 // pred_fallthru
          _
      $region60: #{tpu_custom_call.1} parent=5 // pred_fallthru
        _
      %p1338 = scmp.le.s32.totalorder 2, %s19
      // Predicated region
      $region65: #{tpu_custom_call.1} parent=5 // pred_check
        %p1339 = pneg %p1338
      $region66: #{tpu_custom_call.1} parent=5 // pred_check_branch
        %1341 = sbr.rel (%p1339) target = $region68
      $region67: #{tpu_custom_call.1} parent=5 // pred_region
        %s1342 = ssub.s32 %s19, 2
        // Predicated region
        $region69: #{tpu_custom_call.1} parent=67 // pred_check
          %p1343 = pneg %p263
        $region70: #{tpu_custom_call.1} parent=67 // pred_check_branch
          %1345 = sbr.rel (%p1343) target = $region72
        $region71: #{tpu_custom_call.1} parent=67 // pred_region
          %s1346 = sand.u32 %s248, 1
          %s1347 = scalar_lea.sflag [#allocation3], %s1346
          %s1348 = sand.u32 %s248, 1
          %s1349 = smul.addr %s1348, 64
          %s1350 = scalar_lea.vmem [#allocation2], %s1349
          %1351 = dma.done %s1347, 1024
        $region72: #{tpu_custom_call.1} parent=67 // pred_fallthru
          _
      $region68: #{tpu_custom_call.1} parent=5 // pred_fallthru
        _
    $region6: #{tpu_custom_call.1} parent=1 // loop_footer
      %s23 = sadd.s32 1, %s19
    $region7: #{tpu_custom_call.1} parent=1 // loop_footer_branch
      %18 = sbr.rel target = $region3
    $region8: #{tpu_custom_call.1} parent=1 // loop_exit
      _
    %1352 = vsyncpa [#allocation3], 1
    %s1353 = scalar_lea.sflag [#allocation3], 1
    %1354 = vsyncpa %s1353, 1

</llo_original>
